<compile_context>
chip_gen: v7x
topology: tpu7x:2x2x1
jax: 0.10.0
libtpu: 0.0.40
codegen_flags: <defaults>
</compile_context>

<pallas_src>
import functools

import jax
import jax.numpy as jnp
from jax import lax
from jax.experimental import pallas as pl
from jax.experimental.pallas import tpu as pltpu


def _round_up(x, m):
    return ((x + m - 1) // m) * m


# ---------------------------------------------------------------------------
# Kernels
# ---------------------------------------------------------------------------

def _second_layer(h, w2t_ref, b2_ref, out_ref):
    """out = h @ w2 + b2, h is f32 [tile, hp]."""
    out_dim = out_ref.shape[1]
    if out_dim == 1:
        # VPU multiply + lane reduction; keeps the MXU free of 1-column matmuls.
        # b2 arrives as an SMEM scalar (no (1,1) VMEM block / extra DMA).
        w2_row = w2t_ref[...].astype(jnp.float32)            # [1, hp]
        out = jnp.sum(h * w2_row, axis=1, keepdims=True) + b2_ref[0, 0]
    else:
        out = lax.dot_general(h.astype(w2t_ref.dtype), w2t_ref[...],
                              dimension_numbers=(((1,), (1,)), ((), ())),
                              preferred_element_type=jnp.float32) + b2_ref[...]
    # [tile, out_dim] store is lane-sparse for out_dim=1 but only 4 B/edge.
    out_ref[...] = out.astype(out_ref.dtype)


def alphanet_twohot_kernel(idx_ref, ea_ref, xw_ref, we_ref, b1_ref,
                           w2t_ref, b2_ref, out_ref):
    """Small-N path: in-kernel gather via a two-hot selector matmul.

    h = relu(twohot @ [x@Ws ; x@Wd] + edge_attr @ We_folded + b1_folded)
    """
    two_n = xw_ref.shape[0]
    n = two_n // 2
    idx = idx_ref[...]                                       # [tile, 2] int32
    src = idx[:, 0:1]                                        # [tile, 1]
    dst = idx[:, 1:2] + n                                    # [tile, 1]
    cols = lax.broadcasted_iota(jnp.int32, (idx.shape[0], two_n), 1)
    hot = jnp.logical_or(cols == src, cols == dst)
    twohot = jnp.where(hot, 1.0, 0.0).astype(jnp.bfloat16)   # [tile, 2N]

    h = jnp.dot(twohot, xw_ref[...], preferred_element_type=jnp.float32)
    h = h + jnp.dot(ea_ref[...].astype(jnp.bfloat16), we_ref[...],
                    preferred_element_type=jnp.float32)
    h = jnp.maximum(h + b1_ref[...], 0.0)
    _second_layer(h, w2t_ref, b2_ref, out_ref)


def alphanet_fused_kernel(feat_ref, w_ref, b1_ref, w2t_ref, b2_ref, out_ref):
    """Large-N fallback: one fused K = 2*in_dim+edge_dim matmul over the
    pre-gathered, pre-concatenated bf16 edge-feature stream."""
    h = jnp.dot(feat_ref[...], w_ref[...], preferred_element_type=jnp.float32)
    h = jnp.maximum(h + b1_ref[...], 0.0)
    _second_layer(h, w2t_ref, b2_ref, out_ref)


# ---------------------------------------------------------------------------
# Wrapper
# ---------------------------------------------------------------------------

@functools.partial(jax.jit, static_argnames=("tile_e", "force_fused_stream"))
def alphanet_forward(x, edge_index, edge_attr, params, *, tile_e=2048,
                     force_fused_stream=False):
    """AlphaNet forward (edge_dim > 1 path).

    x          : [N, in_dim]   float32 node features
    edge_index : [2, E]        int32 src/dst node indices
    edge_attr  : [E, edge_dim] float edge features
    """
    x = x.astype(jnp.float32)
    edge_attr = edge_attr.astype(jnp.float32)
    edge_index = edge_index.astype(jnp.int32)

    N, in_dim = x.shape
    E = edge_index.shape[1]
    edge_dim = edge_attr.shape[1]
    hidden = params["wn"].shape[1]
    out_dim = params["w2"].shape[1]

    # ---- fold linear_node_attr / linear_edge_attr into mlp.Linear1 (exact) --
    w1a = params["w1"][:hidden, :]
    w1b = params["w1"][hidden:, :]
    wn_f = params["wn"] @ w1a                                 # [2*in_dim, H]
    we_f = params["we"] @ w1b                                 # [edge_dim, H]
    b1_f = params["bn"] @ w1a + params["be"] @ w1b + params["b1"]   # [1, H]

    # ---- pad hidden to a lane-dense width (zero-pad is exact) ---------------
    # 128-multiples up to 128; 256-multiples beyond (v6e/v7x MXU is 256 wide).
    hp = _round_up(hidden, 128) if hidden <= 128 else _round_up(hidden, 256)
    ph = hp - hidden
    wn_f = jnp.pad(wn_f, ((0, 0), (0, ph)))
    we_f = jnp.pad(we_f, ((0, 0), (0, ph)))
    b1_f = jnp.pad(b1_f, ((0, 0), (0, ph)))
    w2t = jnp.pad(params["w2"], ((0, ph), (0, 0))).T          # [out_dim, hp]
    ws_f = wn_f[:in_dim]                                      # acts on x[src]
    wd_f = wn_f[in_dim:]                                      # acts on x[dst]

    # ---- tiling: bf16-aligned tiles, >= 8 grid steps when E allows ----------
    tile = min(tile_e, _round_up(max(pl.cdiv(E, 8), 16), 16))
    tile = _round_up(tile, 16)
    E_pad = _round_up(E, tile)
    grid = (E_pad // tile,)
    pad_e = E_pad - E

    # Pad the small per-edge arrays *before* any gather so the big streams are
    # materialized exactly once.  Padded rows reference node 0 / zero attrs;
    # their (nonzero) outputs are sliced off at the end -- do not consume the
    # padded output directly.
    ei = edge_index
    ea = edge_attr
    if pad_e:
        ei = jnp.pad(ei, ((0, 0), (0, pad_e)))
        ea = jnp.pad(ea, ((0, pad_e), (0, 0)))

    if out_dim == 1:
        b2 = params["b2"].reshape(1, 1).astype(jnp.float32)
        b2_spec = pl.BlockSpec(memory_space=pltpu.MemorySpace.SMEM)
    else:
        b2 = params["b2"].astype(jnp.float32)                 # [1, out_dim]
        b2_spec = pl.BlockSpec((1, out_dim), lambda i: (0, 0))

    w2t_b = w2t.astype(jnp.bfloat16)
    out_shape = jax.ShapeDtypeStruct((E_pad, out_dim), jnp.float32)
    out_spec = pl.BlockSpec((tile, out_dim), lambda i: (i, 0))
    compiler_params = pltpu.CompilerParams(
        dimension_semantics=("parallel",),
        vmem_limit_bytes=32 * 1024 * 1024)

    # In-kernel gather path only pays off when the two-hot K (= 2N) is small;
    # it also guarantees xw and the twohot intermediate stay comfortably in
    # VMEM/vregs.
    use_twohot = (not force_fused_stream) and (2 * N <= 512)

    if use_twohot:
        # Node projections live in VMEM; the gather never touches HBM.
        xw = jnp.concatenate([x @ ws_f, x @ wd_f], axis=0).astype(jnp.bfloat16)
        idx_t = ei.T                                          # [E_pad, 2] int32
        cost = pl.CostEstimate(
            flops=2 * E_pad * hp * (2 * N + edge_dim + out_dim),
            transcendentals=0,
            bytes_accessed=(E_pad * (2 * 4 + edge_dim * 4 + out_dim * 4)
                            + (2 * N + edge_dim + out_dim) * hp * 2
                            + (hp + out_dim) * 4))
        alpha = pl.pallas_call(
            alphanet_twohot_kernel,
            out_shape=out_shape,
            grid_spec=pltpu.PrefetchScalarGridSpec(
                num_scalar_prefetch=0,
                grid=grid,
                in_specs=[
                    pl.BlockSpec((tile, 2), lambda i: (i, 0)),         # idx
                    pl.BlockSpec((tile, edge_dim), lambda i: (i, 0)),  # ea f32
                    pl.BlockSpec((2 * N, hp), lambda i: (0, 0)),       # [x@Ws;x@Wd]
                    pl.BlockSpec((edge_dim, hp), lambda i: (0, 0)),    # We folded
                    pl.BlockSpec((1, hp), lambda i: (0, 0)),           # b1 folded
                    pl.BlockSpec((out_dim, hp), lambda i: (0, 0)),     # w2^T
                    b2_spec,
                ],
                out_specs=out_spec),
            compiler_params=compiler_params,
            cost_estimate=cost,
        )(idx_t, ea, xw, we_f.astype(jnp.bfloat16), b1_f, w2t_b, b2)
    else:
        # Large-N fallback: gather outside the kernel (one fused XLA
        # gather+concat writes the already-padded bf16 stream exactly once),
        # then a single fused-K matmul in the kernel.
        xb = x.astype(jnp.bfloat16)
        # NOTE: jnp.take clips out-of-range indices instead of failing.
        feat = jnp.concatenate(
            [jnp.take(xb, ei[0], axis=0),
             jnp.take(xb, ei[1], axis=0),
             ea.astype(jnp.bfloat16)], axis=1)                # [E_pad, Kc]
        kc = 2 * in_dim + edge_dim
        w_stack = jnp.concatenate([ws_f, wd_f, we_f], axis=0).astype(jnp.bfloat16)
        cost = pl.CostEstimate(
            flops=2 * E_pad * hp * (kc + out_dim),
            transcendentals=0,
            bytes_accessed=(E_pad * (kc * 2 + out_dim * 4)
                            + (kc + out_dim) * hp * 2
                            + (hp + out_dim) * 4))
        alpha = pl.pallas_call(
            alphanet_fused_kernel,
            out_shape=out_shape,
            grid_spec=pltpu.PrefetchScalarGridSpec(
                num_scalar_prefetch=0,
                grid=grid,
                in_specs=[
                    pl.BlockSpec((tile, kc), lambda i: (i, 0)),        # edge stream
                    pl.BlockSpec((kc, hp), lambda i: (0, 0)),          # stacked W
                    pl.BlockSpec((1, hp), lambda i: (0, 0)),           # b1 folded
                    pl.BlockSpec((out_dim, hp), lambda i: (0, 0)),     # w2^T
                    b2_spec,
                ],
                out_specs=out_spec),
            compiler_params=compiler_params,
            cost_estimate=cost,
        )(feat, w_stack, b1_f, w2t_b, b2)

    return alpha[:E]


# ---------------------------------------------------------------------------
# Params / reference
# ---------------------------------------------------------------------------

def init_params(key, in_dim, edge_dim, hidden_dim, out_dim=1):
    """Deterministic kaiming-normal-style init (matches AlphaNet shapes).
    Weights stored pre-transposed: [in_features, out_features]."""
    ks = jax.random.split(key, 8)

    def kaiming(k, fan_in, fan_out):
        std = jnp.sqrt(2.0 / fan_in)
        return jax.random.normal(k, (fan_in, fan_out), jnp.float32) * std

    def bias(k, fan_in, fan_out):
        bound = 1.0 / jnp.sqrt(fan_in)
        return jax.random.uniform(k, (1, fan_out), jnp.float32, -bound, bound)

    return {
        "wn": kaiming(ks[0], 2 * in_dim, hidden_dim),   # linear_node_attr
        "bn": bias(ks[1], 2 * in_dim, hidden_dim),
        "we": kaiming(ks[2], edge_dim, hidden_dim),     # linear_edge_attr
        "be": bias(ks[3], edge_dim, hidden_dim),
        "w1": kaiming(ks[4], 2 * hidden_dim, hidden_dim),   # mlp.Linear1
        "b1": bias(ks[5], 2 * hidden_dim, hidden_dim),
        "w2": kaiming(ks[6], hidden_dim, out_dim),          # mlp.Linear2
        "b2": bias(ks[7], hidden_dim, out_dim),
    }


def alphanet_reference(x, edge_index, edge_attr, params):
    """Pure-JAX f32 reference of the PyTorch forward (edge_dim > 1)."""
    e = jnp.concatenate([x[edge_index[0]], x[edge_index[1]]], axis=1)
    e1 = e @ params["wn"] + params["bn"]
    e2 = edge_attr.astype(jnp.float32) @ params["we"] + params["be"]
    cat = jnp.concatenate([e1, e2], axis=1)
    h = jnp.maximum(cat @ params["w1"] + params["b1"], 0.0)
    return h @ params["w2"] + params["b2"]


if __name__ == "__main__":
    # Small shapes consistent with the module's forward.
    N, in_dim, edge_dim, hidden_dim, out_dim = 64, 8, 4, 32, 1
    E = 2048   # tile 256 -> 8 "parallel" grid steps

    key = jax.random.PRNGKey(0)
    k_x, k_idx, k_attr, k_params = jax.random.split(key, 4)

    x = jax.random.normal(k_x, (N, in_dim), jnp.float32)
    edge_index = jax.random.randint(k_idx, (2, E), 0, N, jnp.int32)
    edge_attr = jax.random.normal(k_attr, (E, edge_dim), jnp.float32)
    params = init_params(k_params, in_dim, edge_dim, hidden_dim, out_dim)

    ref = alphanet_reference(x, edge_index, edge_attr, params)

    # Path 1: in-kernel two-hot gather (auto-selected for small N).
    alpha = alphanet_forward(x, edge_index, edge_attr, params)
    jax.block_until_ready(alpha)
    assert alpha.shape == (E, out_dim)
    err1 = jnp.max(jnp.abs(alpha - ref))
    assert jnp.allclose(alpha, ref, atol=5e-2, rtol=5e-2), f"twohot max err {err1}"

    # Path 2: large-N fallback (pre-gathered fused-K stream), exercised too.
    alpha2 = alphanet_forward(x, edge_index, edge_attr, params,
                              force_fused_stream=True)
    jax.block_until_ready(alpha2)
    err2 = jnp.max(jnp.abs(alpha2 - ref))
    assert jnp.allclose(alpha2, ref, atol=5e-2, rtol=5e-2), f"fused max err {err2}"

    print("KERNEL_OK")
</pallas_src>

<mosaic_0001>
module attributes {stable_mosaic.version = 11 : i64} {
  func.func @alphanet_twohot_kernel(%arg0: i32, %arg1: memref<256x2xi32, #tpu.memory_space<vmem>>, %arg2: memref<256x4xf32, #tpu.memory_space<vmem>>, %arg3: memref<128x128xbf16, #tpu.memory_space<vmem>>, %arg4: memref<4x128xbf16, #tpu.memory_space<vmem>>, %arg5: memref<1x128xf32, #tpu.memory_space<vmem>>, %arg6: memref<1x128xbf16, #tpu.memory_space<vmem>>, %arg7: memref<1x1xf32, #tpu.memory_space<smem>>, %arg8: memref<256x1xf32, #tpu.memory_space<vmem>>) attributes {dimension_semantics = [#tpu.dimension_semantics<parallel>], iteration_bounds = array<i64: 8>, scalar_prefetch = 0 : i64, scratch_operands = 0 : i64, tpu.core_type = #tpu.core_type<tc>, window_params = [{transform_indices = @transform_0, window_bounds = array<i64: 256, 2>}, {transform_indices = @transform_1, window_bounds = array<i64: 256, 4>}, {pipeline_mode = #tpu.pipeline_mode<synchronous>, transform_indices = @transform_2, window_bounds = array<i64: 128, 128>}, {pipeline_mode = #tpu.pipeline_mode<synchronous>, transform_indices = @transform_3, window_bounds = array<i64: 4, 128>}, {pipeline_mode = #tpu.pipeline_mode<synchronous>, transform_indices = @transform_4, window_bounds = array<i64: 1, 128>}, {pipeline_mode = #tpu.pipeline_mode<synchronous>, transform_indices = @transform_5, window_bounds = array<i64: 1, 128>}, {transform_indices = @transform_6, window_bounds = array<i64: 1, 1>}, {transform_indices = @transform_7, window_bounds = array<i64: 256, 1>}]} {
    %c0 = arith.constant 0 : index
    %c0_0 = arith.constant 0 : index
    %0 = vector.load %arg1[%c0, %c0_0] : memref<256x2xi32, #tpu.memory_space<vmem>>, vector<256x2xi32>
    %1 = vector.extract_strided_slice %0 {offsets = [0, 0], sizes = [256, 1], strides = [1, 1]} : vector<256x2xi32> to vector<256x1xi32>
    %2 = vector.extract_strided_slice %0 {offsets = [0, 1], sizes = [256, 1], strides = [1, 1]} : vector<256x2xi32> to vector<256x1xi32>
    %c64_i32 = arith.constant 64 : i32
    %3 = vector.broadcast %c64_i32 : i32 to vector<256x1xi32>
    %4 = arith.addi %2, %3 : vector<256x1xi32>
    %5 = tpu.iota {dimensions = array<i32: 1>} : vector<256x128xi32>
    %6 = vector.broadcast %1 : vector<256x1xi32> to vector<256x128xi32>
    %7 = arith.cmpi eq, %5, %6 : vector<256x128xi32>
    %8 = vector.broadcast %4 : vector<256x1xi32> to vector<256x128xi32>
    %9 = arith.cmpi eq, %5, %8 : vector<256x128xi32>
    %10 = arith.ori %7, %9 : vector<256x128xi1>
    %cst = arith.constant 1.000000e+00 : f32
    %cst_1 = arith.constant 0.000000e+00 : f32
    %11 = vector.broadcast %cst : f32 to vector<256x128xf32>
    %12 = vector.broadcast %cst_1 : f32 to vector<256x128xf32>
    %13 = arith.select %10, %11, %12 : vector<256x128xi1>, vector<256x128xf32>
    %14 = arith.truncf %13 : vector<256x128xf32> to vector<256x128xbf16>
    %c0_2 = arith.constant 0 : index
    %c0_3 = arith.constant 0 : index
    %15 = vector.load %arg3[%c0_2, %c0_3] : memref<128x128xbf16, #tpu.memory_space<vmem>>, vector<128x128xbf16>
    %cst_4 = arith.constant dense<0.000000e+00> : vector<256x128xf32>
    %16 = tpu.matmul %14, %15, %cst_4 {dimension_numbers = #tpu.dot_dimension_numbers<[1], [0], [0], [1], [0, 0, 1, 1], [], []>} : vector<256x128xbf16>, vector<128x128xbf16>, vector<256x128xf32> -> vector<256x128xf32>
    %c0_5 = arith.constant 0 : index
    %c0_6 = arith.constant 0 : index
    %17 = vector.load %arg2[%c0_5, %c0_6] : memref<256x4xf32, #tpu.memory_space<vmem>>, vector<256x4xf32>
    %18 = arith.truncf %17 : vector<256x4xf32> to vector<256x4xbf16>
    %c0_7 = arith.constant 0 : index
    %c0_8 = arith.constant 0 : index
    %19 = vector.load %arg4[%c0_7, %c0_8] : memref<4x128xbf16, #tpu.memory_space<vmem>>, vector<4x128xbf16>
    %cst_9 = arith.constant dense<0.000000e+00> : vector<256x128xf32>
    %20 = tpu.matmul %18, %19, %cst_9 {dimension_numbers = #tpu.dot_dimension_numbers<[1], [0], [0], [1], [0, 0, 1, 1], [], []>} : vector<256x4xbf16>, vector<4x128xbf16>, vector<256x128xf32> -> vector<256x128xf32>
    %21 = arith.addf %16, %20 : vector<256x128xf32>
    %c0_10 = arith.constant 0 : index
    %c0_11 = arith.constant 0 : index
    %22 = vector.load %arg5[%c0_10, %c0_11] : memref<1x128xf32, #tpu.memory_space<vmem>>, vector<1x128xf32>
    %23 = vector.broadcast %22 : vector<1x128xf32> to vector<256x128xf32>
    %24 = arith.addf %21, %23 : vector<256x128xf32>
    %cst_12 = arith.constant 0.000000e+00 : f32
    %25 = vector.broadcast %cst_12 : f32 to vector<256x128xf32>
    %26 = arith.maximumf %24, %25 : vector<256x128xf32>
    %c0_13 = arith.constant 0 : index
    %c0_14 = arith.constant 0 : index
    %27 = vector.load %arg6[%c0_13, %c0_14] : memref<1x128xbf16, #tpu.memory_space<vmem>>, vector<1x128xbf16>
    %28 = arith.extf %27 : vector<1x128xbf16> to vector<1x128xf32>
    %29 = vector.broadcast %28 : vector<1x128xf32> to vector<256x128xf32>
    %30 = arith.mulf %26, %29 : vector<256x128xf32>
    %cst_15 = arith.constant dense<0.000000e+00> : vector<256xf32>
    %31 = vector.multi_reduction <add>, %30, %cst_15 [1] : vector<256x128xf32> to vector<256xf32>
    %32 = vector.shape_cast %31 : vector<256xf32> to vector<256x1xf32>
    %c0_16 = arith.constant 0 : index
    %c0_17 = arith.constant 0 : index
    %33 = memref.load %arg7[%c0_16, %c0_17] : memref<1x1xf32, #tpu.memory_space<smem>>
    %34 = vector.broadcast %33 : f32 to vector<256x1xf32>
    %35 = arith.addf %32, %34 : vector<256x1xf32>
    %c0_18 = arith.constant 0 : index
    %c0_19 = arith.constant 0 : index
    %36 = vector.load %arg8[%c0_18, %c0_19] : memref<256x1xf32, #tpu.memory_space<vmem>>, vector<256x1xf32>
    tpu.vector_store %arg8[%c0_18, %c0_19], %35 {strides = array<i32>} : memref<256x1xf32, #tpu.memory_space<vmem>>, vector<256x1xf32>,
    return
  }
  func.func @transform_0(%arg0: i32) -> (i32, i32) {
    %c0_i32 = arith.constant 0 : i32
    %c0_i32_0 = arith.constant 0 : i32
    return %arg0, %c0_i32 : i32, i32
  }
  func.func @transform_1(%arg0: i32) -> (i32, i32) {
    %c0_i32 = arith.constant 0 : i32
    %c0_i32_0 = arith.constant 0 : i32
    return %arg0, %c0_i32 : i32, i32
  }
  func.func @transform_2(%arg0: i32) -> (i32, i32) {
    %c0_i32 = arith.constant 0 : i32
    %c0_i32_0 = arith.constant 0 : i32
    %c0_i32_1 = arith.constant 0 : i32
    return %c0_i32, %c0_i32_0 : i32, i32
  }
  func.func @transform_3(%arg0: i32) -> (i32, i32) {
    %c0_i32 = arith.constant 0 : i32
    %c0_i32_0 = arith.constant 0 : i32
    %c0_i32_1 = arith.constant 0 : i32
    return %c0_i32, %c0_i32_0 : i32, i32
  }
  func.func @transform_4(%arg0: i32) -> (i32, i32) {
    %c0_i32 = arith.constant 0 : i32
    %c0_i32_0 = arith.constant 0 : i32
    %c0_i32_1 = arith.constant 0 : i32
    return %c0_i32, %c0_i32_0 : i32, i32
  }
  func.func @transform_5(%arg0: i32) -> (i32, i32) {
    %c0_i32 = arith.constant 0 : i32
    %c0_i32_0 = arith.constant 0 : i32
    %c0_i32_1 = arith.constant 0 : i32
    return %c0_i32, %c0_i32_0 : i32, i32
  }
  func.func @transform_6(%arg0: i32) -> (i32, i32) {
    %c0_i32 = arith.constant 0 : i32
    %c0_i32_0 = arith.constant 0 : i32
    %c0_i32_1 = arith.constant 0 : i32
    return %c0_i32, %c0_i32_0 : i32, i32
  }
  func.func @transform_7(%arg0: i32) -> (i32, i32) {
    %c0_i32 = arith.constant 0 : i32
    %c0_i32_0 = arith.constant 0 : i32
    return %arg0, %c0_i32 : i32, i32
  }
}

</mosaic_0001>

<llo_original>
// kernel: alphanet_forward.1
$region0: #{alphanet_forward.1}
  #allocation0 [shape = 'u32[]', space=smem, size = 0x4, offset = 0x4, fixed_abs, tag = 'smem constant byte address 0x4 - core index']
  #allocation1 [shape = 'u32[144,128]{1,0:T(1,128)}', space=vmem, size = 0x12000, scoped, tag = 'internal scratch']
  #allocation2 [shape = 'f32[1,1]{1,0:T(1,128)S(6)}', space=smem, size = 0x200, scoped, tag = 'scoped memory for alphanet_forward.1']
  %s0 = inlined_call_operand.vmem [shape: s32[2048,2], index: 0, kind: input, shape index: {}]
  %s1 = inlined_call_operand.vmem [shape: f32[2048,4], index: 1, kind: input, shape index: {}]
  %s2 = inlined_call_operand.vmem [shape: bf16[128,128], index: 2, kind: input, shape index: {}]
  %s3 = inlined_call_operand.vmem [shape: bf16[4,128], index: 3, kind: input, shape index: {}]
  %s4 = inlined_call_operand.vmem [shape: f32[1,128], index: 4, kind: input, shape index: {}]
  %s5 = inlined_call_operand.vmem [shape: bf16[1,128], index: 5, kind: input, shape index: {}]
  %s6 = inlined_call_operand.<no memory space> [shape: f32[1,1], index: 6, kind: input, shape index: {}]
  %s7 = inlined_call_operand.vmem [shape: f32[2048,1], index: 7, kind: output, shape index: {}]
  %s8 = sld [smem:[#allocation0]]
  $region61: #{alphanet_forward.1} parent=0
    _
  %s10 = ssub.s32 1, %s8
  %s11 = scalar_select 0, %s10, %s8
  %12 = sst [smem:[#allocation2]] %s6
  loop: start=0, step=1, limit=10
  $region2: #{alphanet_forward.1} parent=0 // loop_pre_header
    _
  $region3: #{alphanet_forward.1} parent=0 // loop_header
    %s14 = sphi 0, %s18
    %p15 = scmp.ge.s32.totalorder %s14, 10
    %s24 = sphi 0, %s26
    %s27 = sphi 0, %s24
    %s28 = sphi 0, %s27
    %s44 = sphi 0, %s28
    %s50 = sphi 0, %s52
    %s53 = sphi 0, %s50
    %s54 = sphi 0, %s53
    %s70 = sphi 0, %s54
    %s74 = sphi 0, %s74
    %s76 = sphi 0, %s74
    %s77 = sphi 0, %s76
    %s91 = sphi 0, %s77
    %s95 = sphi 0, %s95
    %s97 = sphi 0, %s95
    %s98 = sphi 0, %s97
    %s112 = sphi 0, %s98
    %s116 = sphi 0, %s116
    %s118 = sphi 0, %s116
    %s119 = sphi 0, %s118
    %s133 = sphi 0, %s119
    %s137 = sphi 0, %s137
    %s139 = sphi 0, %s137
    %s140 = sphi 0, %s139
    %s154 = sphi 0, %s140
    %s158 = sphi 0, %s158
    %s160 = sphi 0, %s158
    %s161 = sphi 0, %s160
    %s175 = sphi 0, %s161
    %s181 = sphi 0, %s183
    %s184 = sphi 0, %s181
    %s185 = sphi 0, %s184
    %s201 = sphi 0, %s185
  $region4: #{alphanet_forward.1} parent=0 // loop_header_branch
    %17 = sbr.rel (%p15) target = $region8
  $region5: #{alphanet_forward.1} parent=0 // loop_body
    %s19 = ssub.s32 %s14, 1
    %s20 = ssub.s32 %s14, 2
    %s21 = sadd.s32 %s14, 1
    %s22 = ssub.s32 %s14, %s21
    %p23 = scmp.eq.s32.totalorder %s22, 0
    %s25 = sadd.s32 %s24, 1
    %s26 = scalar_select %p23, %s24, %s25
    %p29 = pneg %p23
    %p30 = scmp.eq.s32.totalorder %s14, 7
    %p31 = por %p29, %p30
    %p32 = scmp.ne.s32.totalorder %s24, %s27
    %p33 = scmp.eq.s32.totalorder %s14, 0
    %p34 = por %p32, %p33
    %p35 = scmp.ne.s32.totalorder %s24, %s27
    %p36 = scmp.eq.s32.totalorder %s19, 7
    %p37 = por %p35, %p36
    %p38 = scmp.ne.s32.totalorder %s27, %s28
    %p39 = scmp.eq.s32.totalorder %s19, 0
    %p40 = por %p38, %p39
    %p41 = scmp.ne.s32.totalorder %s27, %s28
    %p42 = scmp.eq.s32.totalorder %s20, 7
    %p43 = por %p41, %p42
    %p45 = scmp.ne.s32.totalorder %s28, %s44
    %p46 = scmp.eq.s32.totalorder %s20, 0
    %p47 = por %p45, %p46
    %s48 = ssub.s32 %s14, %s21
    %p49 = scmp.eq.s32.totalorder %s48, 0
    %s51 = sadd.s32 %s50, 1
    %s52 = scalar_select %p49, %s50, %s51
    %p55 = pneg %p49
    %p56 = scmp.eq.s32.totalorder %s14, 7
    %p57 = por %p55, %p56
    %p58 = scmp.ne.s32.totalorder %s50, %s53
    %p59 = scmp.eq.s32.totalorder %s14, 0
    %p60 = por %p58, %p59
    %p61 = scmp.ne.s32.totalorder %s50, %s53
    %p62 = scmp.eq.s32.totalorder %s19, 7
    %p63 = por %p61, %p62
    %p64 = scmp.ne.s32.totalorder %s53, %s54
    %p65 = scmp.eq.s32.totalorder %s19, 0
    %p66 = por %p64, %p65
    %p67 = scmp.ne.s32.totalorder %s53, %s54
    %p68 = scmp.eq.s32.totalorder %s20, 7
    %p69 = por %p67, %p68
    %p71 = scmp.ne.s32.totalorder %s54, %s70
    %p72 = scmp.eq.s32.totalorder %s20, 0
    %p73 = por %p71, %p72
    %s75 = sadd.s32 %s74, 1
    %p78 = scmp.eq.s32.totalorder %s14, 7
    %p79 = scmp.ne.s32.totalorder %s74, %s76
    %p80 = scmp.eq.s32.totalorder %s14, 0
    %p81 = por %p79, %p80
    %p82 = scmp.ne.s32.totalorder %s74, %s76
    %p83 = scmp.eq.s32.totalorder %s19, 7
    %p84 = por %p82, %p83
    %p85 = scmp.ne.s32.totalorder %s76, %s77
    %p86 = scmp.eq.s32.totalorder %s19, 0
    %p87 = por %p85, %p86
    %p88 = scmp.ne.s32.totalorder %s76, %s77
    %p89 = scmp.eq.s32.totalorder %s20, 7
    %p90 = por %p88, %p89
    %p92 = scmp.ne.s32.totalorder %s77, %s91
    %p93 = scmp.eq.s32.totalorder %s20, 0
    %p94 = por %p92, %p93
    %s96 = sadd.s32 %s95, 1
    %p99 = scmp.eq.s32.totalorder %s14, 7
    %p100 = scmp.ne.s32.totalorder %s95, %s97
    %p101 = scmp.eq.s32.totalorder %s14, 0
    %p102 = por %p100, %p101
    %p103 = scmp.ne.s32.totalorder %s95, %s97
    %p104 = scmp.eq.s32.totalorder %s19, 7
    %p105 = por %p103, %p104
    %p106 = scmp.ne.s32.totalorder %s97, %s98
    %p107 = scmp.eq.s32.totalorder %s19, 0
    %p108 = por %p106, %p107
    %p109 = scmp.ne.s32.totalorder %s97, %s98
    %p110 = scmp.eq.s32.totalorder %s20, 7
    %p111 = por %p109, %p110
    %p113 = scmp.ne.s32.totalorder %s98, %s112
    %p114 = scmp.eq.s32.totalorder %s20, 0
    %p115 = por %p113, %p114
    %s117 = sadd.s32 %s116, 1
    %p120 = scmp.eq.s32.totalorder %s14, 7
    %p121 = scmp.ne.s32.totalorder %s116, %s118
    %p122 = scmp.eq.s32.totalorder %s14, 0
    %p123 = por %p121, %p122
    %p124 = scmp.ne.s32.totalorder %s116, %s118
    %p125 = scmp.eq.s32.totalorder %s19, 7
    %p126 = por %p124, %p125
    %p127 = scmp.ne.s32.totalorder %s118, %s119
    %p128 = scmp.eq.s32.totalorder %s19, 0
    %p129 = por %p127, %p128
    %p130 = scmp.ne.s32.totalorder %s118, %s119
    %p131 = scmp.eq.s32.totalorder %s20, 7
    %p132 = por %p130, %p131
    %p134 = scmp.ne.s32.totalorder %s119, %s133
    %p135 = scmp.eq.s32.totalorder %s20, 0
    %p136 = por %p134, %p135
    %s138 = sadd.s32 %s137, 1
    %p141 = scmp.eq.s32.totalorder %s14, 7
    %p142 = scmp.ne.s32.totalorder %s137, %s139
    %p143 = scmp.eq.s32.totalorder %s14, 0
    %p144 = por %p142, %p143
    %p145 = scmp.ne.s32.totalorder %s137, %s139
    %p146 = scmp.eq.s32.totalorder %s19, 7
    %p147 = por %p145, %p146
    %p148 = scmp.ne.s32.totalorder %s139, %s140
    %p149 = scmp.eq.s32.totalorder %s19, 0
    %p150 = por %p148, %p149
    %p151 = scmp.ne.s32.totalorder %s139, %s140
    %p152 = scmp.eq.s32.totalorder %s20, 7
    %p153 = por %p151, %p152
    %p155 = scmp.ne.s32.totalorder %s140, %s154
    %p156 = scmp.eq.s32.totalorder %s20, 0
    %p157 = por %p155, %p156
    %s159 = sadd.s32 %s158, 1
    %p162 = scmp.eq.s32.totalorder %s14, 7
    %p163 = scmp.ne.s32.totalorder %s158, %s160
    %p164 = scmp.eq.s32.totalorder %s14, 0
    %p165 = por %p163, %p164
    %p166 = scmp.ne.s32.totalorder %s158, %s160
    %p167 = scmp.eq.s32.totalorder %s19, 7
    %p168 = por %p166, %p167
    %p169 = scmp.ne.s32.totalorder %s160, %s161
    %p170 = scmp.eq.s32.totalorder %s19, 0
    %p171 = por %p169, %p170
    %p172 = scmp.ne.s32.totalorder %s160, %s161
    %p173 = scmp.eq.s32.totalorder %s20, 7
    %p174 = por %p172, %p173
    %p176 = scmp.ne.s32.totalorder %s161, %s175
    %p177 = scmp.eq.s32.totalorder %s20, 0
    %p178 = por %p176, %p177
    %s179 = ssub.s32 %s14, %s21
    %p180 = scmp.eq.s32.totalorder %s179, 0
    %s182 = sadd.s32 %s181, 1
    %s183 = scalar_select %p180, %s181, %s182
    %p186 = pneg %p180
    %p187 = scmp.eq.s32.totalorder %s14, 7
    %p188 = por %p186, %p187
    %p189 = scmp.ne.s32.totalorder %s181, %s184
    %p190 = scmp.eq.s32.totalorder %s14, 0
    %p191 = por %p189, %p190
    %p192 = scmp.ne.s32.totalorder %s181, %s184
    %p193 = scmp.eq.s32.totalorder %s19, 7
    %p194 = por %p192, %p193
    %p195 = scmp.ne.s32.totalorder %s184, %s185
    %p196 = scmp.eq.s32.totalorder %s19, 0
    %p197 = por %p195, %p196
    %p198 = scmp.ne.s32.totalorder %s184, %s185
    %p199 = scmp.eq.s32.totalorder %s20, 7
    %p200 = por %p198, %p199
    %p202 = scmp.ne.s32.totalorder %s185, %s201
    %p203 = scmp.eq.s32.totalorder %s20, 0
    %p204 = por %p202, %p203
    %p205 = scmp.le.s32.totalorder 1, %s14
    %p206 = scmp.lt.s32.totalorder %s14, 9
    %p207 = pnand %p205, %p206
    %p208 = pneg %p207
    // Predicated region
    $region9: #{alphanet_forward.1} parent=5 // pred_check
      _
    $region10: #{alphanet_forward.1} parent=5 // pred_check_branch
      %210 = sbr.rel (%p207) target = $region12
    $region11: #{alphanet_forward.1} parent=5 // pred_region
      %s211 = ssub.s32 %s14, 1
      // Predicated region
      $region13: #{alphanet_forward.1} parent=11 // pred_check
        %p212 = pneg %p87
      $region14: #{alphanet_forward.1} parent=11 // pred_check_branch
        %214 = sbr.rel (%p212) target = $region16
      $region15: #{alphanet_forward.1} parent=11 // pred_region
        _
      $region16: #{alphanet_forward.1} parent=11 // pred_fallthru
        _
      // Predicated region
      $region17: #{alphanet_forward.1} parent=11 // pred_check
        %p215 = pneg %p108
      $region18: #{alphanet_forward.1} parent=11 // pred_check_branch
        %217 = sbr.rel (%p215) target = $region20
      $region19: #{alphanet_forward.1} parent=11 // pred_region
        _
      $region20: #{alphanet_forward.1} parent=11 // pred_fallthru
        _
      // Predicated region
      $region21: #{alphanet_forward.1} parent=11 // pred_check
        %p218 = pneg %p129
      $region22: #{alphanet_forward.1} parent=11 // pred_check_branch
        %220 = sbr.rel (%p218) target = $region24
      $region23: #{alphanet_forward.1} parent=11 // pred_region
        _
      $region24: #{alphanet_forward.1} parent=11 // pred_fallthru
        _
      // Predicated region
      $region25: #{alphanet_forward.1} parent=11 // pred_check
        %p221 = pneg %p150
      $region26: #{alphanet_forward.1} parent=11 // pred_check_branch
        %223 = sbr.rel (%p221) target = $region28
      $region27: #{alphanet_forward.1} parent=11 // pred_region
        _
      $region28: #{alphanet_forward.1} parent=11 // pred_fallthru
        _
      // Predicated region
      $region29: #{alphanet_forward.1} parent=11 // pred_check
        %p224 = pneg %p171
      $region30: #{alphanet_forward.1} parent=11 // pred_check_branch
        %226 = sbr.rel (%p224) target = $region32
      $region31: #{alphanet_forward.1} parent=11 // pred_region
        _
      $region32: #{alphanet_forward.1} parent=11 // pred_fallthru
        _
    $region12: #{alphanet_forward.1} parent=5 // pred_fallthru
      _
    %p227 = scmp.lt.s32.totalorder %s14, 8
    // Predicated region
    $region33: #{alphanet_forward.1} parent=5 // pred_check
      %p228 = pneg %p227
    $region34: #{alphanet_forward.1} parent=5 // pred_check_branch
      %230 = sbr.rel (%p228) target = $region36
    $region35: #{alphanet_forward.1} parent=5 // pred_region
      // Predicated region
      $region37: #{alphanet_forward.1} parent=35 // pred_check
        %p231 = pneg %p34
      $region38: #{alphanet_forward.1} parent=35 // pred_check_branch
        %233 = sbr.rel (%p231) target = $region40
      $region39: #{alphanet_forward.1} parent=35 // pred_region
        %s234 = smul.u32 32, %s14
        %p235 = scmp.lt.s32.totalorder %s234, 255
        %s236 = scalar_select %p235, %s234, 255
        %s237 = smul.addr %s236, 8
        %s238 = scalar_lea.vmem %s0, %s237
        %s239 = smul.u32 32, %s14
      $region40: #{alphanet_forward.1} parent=35 // pred_fallthru
        _
      // Predicated region
      $region41: #{alphanet_forward.1} parent=35 // pred_check
        %p240 = pneg %p60
      $region42: #{alphanet_forward.1} parent=35 // pred_check_branch
        %242 = sbr.rel (%p240) target = $region44
      $region43: #{alphanet_forward.1} parent=35 // pred_region
        %s243 = smul.u32 32, %s14
        %p244 = scmp.lt.s32.totalorder %s243, 255
        %s245 = scalar_select %p244, %s243, 255
        %s246 = smul.addr %s245, 8
        %s247 = scalar_lea.vmem %s1, %s246
        %s248 = smul.u32 32, %s14
      $region44: #{alphanet_forward.1} parent=35 // pred_fallthru
        _
    $region36: #{alphanet_forward.1} parent=5 // pred_fallthru
      _
    %p249 = scmp.le.s32.totalorder 1, %s14
    %p250 = scmp.lt.s32.totalorder %s14, 9
    %p251 = pnand %p249, %p250
    %p252 = pneg %p251
    // Predicated region
    $region45: #{alphanet_forward.1} parent=5 // pred_check
      _
    $region46: #{alphanet_forward.1} parent=5 // pred_check_branch
      %254 = sbr.rel (%p251) target = $region48
    $region47: #{alphanet_forward.1} parent=5 // pred_region
      %s255 = ssub.s32 %s14, 1
      %s256 = smul.u32 32, %s19
      %p257 = scmp.lt.s32.totalorder %s256, 255
      %s258 = scalar_select %p257, %s256, 255
      %s259 = smul.addr %s258, 8
      %s260 = scalar_lea.vmem %s0, %s259
      %p261 = pneg %p40
      %p262 = pneg %p37
      %s263 = smul.u32 32, %s19
      %p264 = scmp.lt.s32.totalorder %s263, 255
      %s265 = scalar_select %p264, %s263, 255
      %s266 = smul.addr %s265, 8
      %s267 = scalar_lea.vmem %s1, %s266
      %p268 = pneg %p66
      %p269 = pneg %p63
      %p270 = pneg %p87
      %p271 = pneg %p84
      %p272 = pneg %p108
      %p273 = pneg %p105
      %p274 = pneg %p129
      %p275 = pneg %p126
      %p276 = pneg %p150
      %p277 = pneg %p147
      %p278 = pneg %p171
      %p279 = pneg %p168
      %p280 = pneg %p197
      %p281 = pneg %p194
      %s282 = smul.u32 32, %s19
      %p283 = scmp.lt.s32.totalorder %s282, 255
      %s284 = scalar_select %p283, %s282, 255
      %s285 = smul.addr %s284, 8
      %s286 = scalar_lea.vmem %s7, %s285
      %s287 = smul.u32 32, %s19
      %p288 = scmp.lt.s32.totalorder %s287, 255
      %s289 = scalar_select %p288, %s287, 255
      %s290 = smul.addr %s289, 8
      %s291 = scalar_lea.vmem %s0, %s290
      %s292 = smul.u32 32, %s19
      %s293 = smul.u32 32, %s19
      %p294 = scmp.lt.s32.totalorder %s293, 255
      %s295 = scalar_select %p294, %s293, 255
      %s296 = smul.addr %s295, 8
      %s297 = scalar_lea.vmem %s1, %s296
      %s298 = smul.u32 32, %s19
      %s299 = smul.u32 32, %s19
      %p300 = scmp.lt.s32.totalorder %s299, 255
      %s301 = scalar_select %p300, %s299, 255
      %s302 = smul.addr %s301, 8
      %s303 = scalar_lea.vmem %s7, %s302
      %s304 = smul.u32 32, %s19
      %v306 = vld [vmem:[%s291] sm:$0xff]
      %v307 = vld [vmem:[%s291 + $0x8] sm:$0xff]
      %v308 = vld [vmem:[%s291 + $0x10] sm:$0xff]
      %v309 = vld [vmem:[%s291 + $0x18] sm:$0xff]
      %v310 = vld [vmem:[%s291 + $0x20] sm:$0xff]
      %v311 = vld [vmem:[%s291 + $0x28] sm:$0xff]
      %v312 = vld [vmem:[%s291 + $0x30] sm:$0xff]
      %v313 = vld [vmem:[%s291 + $0x38] sm:$0xff]
      %v314 = vld [vmem:[%s291 + $0x40] sm:$0xff]
      %v315 = vld [vmem:[%s291 + $0x48] sm:$0xff]
      %v316 = vld [vmem:[%s291 + $0x50] sm:$0xff]
      %v317 = vld [vmem:[%s291 + $0x58] sm:$0xff]
      %v318 = vld [vmem:[%s291 + $0x60] sm:$0xff]
      %v319 = vld [vmem:[%s291 + $0x68] sm:$0xff]
      %v320 = vld [vmem:[%s291 + $0x70] sm:$0xff]
      %v321 = vld [vmem:[%s291 + $0x78] sm:$0xff]
      %v322 = vld [vmem:[%s291 + $0x80] sm:$0xff]
      %v323 = vld [vmem:[%s291 + $0x88] sm:$0xff]
      %v324 = vld [vmem:[%s291 + $0x90] sm:$0xff]
      %v325 = vld [vmem:[%s291 + $0x98] sm:$0xff]
      %v326 = vld [vmem:[%s291 + $0xa0] sm:$0xff]
      %v327 = vld [vmem:[%s291 + $0xa8] sm:$0xff]
      %v328 = vld [vmem:[%s291 + $0xb0] sm:$0xff]
      %v329 = vld [vmem:[%s291 + $0xb8] sm:$0xff]
      %v330 = vld [vmem:[%s291 + $0xc0] sm:$0xff]
      %v331 = vld [vmem:[%s291 + $0xc8] sm:$0xff]
      %v332 = vld [vmem:[%s291 + $0xd0] sm:$0xff]
      %v333 = vld [vmem:[%s291 + $0xd8] sm:$0xff]
      %v334 = vld [vmem:[%s291 + $0xe0] sm:$0xff]
      %v335 = vld [vmem:[%s291 + $0xe8] sm:$0xff]
      %v336 = vld [vmem:[%s291 + $0xf0] sm:$0xff]
      %v337 = vld [vmem:[%s291 + $0xf8] sm:$0xff]
      %v338 = vadd.s32 %v306, 64
      %v339 = vadd.s32 %v307, 64
      %v340 = vadd.s32 %v308, 64
      %v341 = vadd.s32 %v309, 64
      %v342 = vadd.s32 %v310, 64
      %v343 = vadd.s32 %v311, 64
      %v344 = vadd.s32 %v312, 64
      %v345 = vadd.s32 %v313, 64
      %v346 = vadd.s32 %v314, 64
      %v347 = vadd.s32 %v315, 64
      %v348 = vadd.s32 %v316, 64
      %v349 = vadd.s32 %v317, 64
      %v350 = vadd.s32 %v318, 64
      %v351 = vadd.s32 %v319, 64
      %v352 = vadd.s32 %v320, 64
      %v353 = vadd.s32 %v321, 64
      %v354 = vadd.s32 %v322, 64
      %v355 = vadd.s32 %v323, 64
      %v356 = vadd.s32 %v324, 64
      %v357 = vadd.s32 %v325, 64
      %v358 = vadd.s32 %v326, 64
      %v359 = vadd.s32 %v327, 64
      %v360 = vadd.s32 %v328, 64
      %v361 = vadd.s32 %v329, 64
      %v362 = vadd.s32 %v330, 64
      %v363 = vadd.s32 %v331, 64
      %v364 = vadd.s32 %v332, 64
      %v365 = vadd.s32 %v333, 64
      %v366 = vadd.s32 %v334, 64
      %v367 = vadd.s32 %v335, 64
      %v368 = vadd.s32 %v336, 64
      %v369 = vadd.s32 %v337, 64
      %v370 = vlaneseq
      %v371 = vand.u32 %v370, 127
      %372 = vset.pattern.permute.xlu0 0
      %373 = vperm.xlu0 %372, %v306
      %v374 = vpop.permute.xlu0 %373
      %375 = vset.pattern.permute.xlu0 0
      %376 = vperm.xlu0 %375, %v307
      %v377 = vpop.permute.xlu0 %376
      %378 = vset.pattern.permute.xlu0 0
      %379 = vperm.xlu0 %378, %v308
      %v380 = vpop.permute.xlu0 %379
      %381 = vset.pattern.permute.xlu0 0
      %382 = vperm.xlu0 %381, %v309
      %v383 = vpop.permute.xlu0 %382
      %384 = vset.pattern.permute.xlu0 0
      %385 = vperm.xlu0 %384, %v310
      %v386 = vpop.permute.xlu0 %385
      %387 = vset.pattern.permute.xlu0 0
      %388 = vperm.xlu0 %387, %v311
      %v389 = vpop.permute.xlu0 %388
      %390 = vset.pattern.permute.xlu0 0
      %391 = vperm.xlu0 %390, %v312
      %v392 = vpop.permute.xlu0 %391
      %393 = vset.pattern.permute.xlu0 0
      %394 = vperm.xlu0 %393, %v313
      %v395 = vpop.permute.xlu0 %394
      %396 = vset.pattern.permute.xlu0 0
      %397 = vperm.xlu0 %396, %v314
      %v398 = vpop.permute.xlu0 %397
      %399 = vset.pattern.permute.xlu0 0
      %400 = vperm.xlu0 %399, %v315
      %v401 = vpop.permute.xlu0 %400
      %402 = vset.pattern.permute.xlu0 0
      %403 = vperm.xlu0 %402, %v316
      %v404 = vpop.permute.xlu0 %403
      %405 = vset.pattern.permute.xlu0 0
      %406 = vperm.xlu0 %405, %v317
      %v407 = vpop.permute.xlu0 %406
      %408 = vset.pattern.permute.xlu0 0
      %409 = vperm.xlu0 %408, %v318
      %v410 = vpop.permute.xlu0 %409
      %411 = vset.pattern.permute.xlu0 0
      %412 = vperm.xlu0 %411, %v319
      %v413 = vpop.permute.xlu0 %412
      %414 = vset.pattern.permute.xlu0 0
      %415 = vperm.xlu0 %414, %v320
      %v416 = vpop.permute.xlu0 %415
      %417 = vset.pattern.permute.xlu0 0
      %418 = vperm.xlu0 %417, %v321
      %v419 = vpop.permute.xlu0 %418
      %420 = vset.pattern.permute.xlu0 0
      %421 = vperm.xlu0 %420, %v322
      %v422 = vpop.permute.xlu0 %421
      %423 = vset.pattern.permute.xlu0 0
      %424 = vperm.xlu0 %423, %v323
      %v425 = vpop.permute.xlu0 %424
      %426 = vset.pattern.permute.xlu0 0
      %427 = vperm.xlu0 %426, %v324
      %v428 = vpop.permute.xlu0 %427
      %429 = vset.pattern.permute.xlu0 0
      %430 = vperm.xlu0 %429, %v325
      %v431 = vpop.permute.xlu0 %430
      %432 = vset.pattern.permute.xlu0 0
      %433 = vperm.xlu0 %432, %v326
      %v434 = vpop.permute.xlu0 %433
      %435 = vset.pattern.permute.xlu0 0
      %436 = vperm.xlu0 %435, %v327
      %v437 = vpop.permute.xlu0 %436
      %438 = vset.pattern.permute.xlu0 0
      %439 = vperm.xlu0 %438, %v328
      %v440 = vpop.permute.xlu0 %439
      %441 = vset.pattern.permute.xlu0 0
      %442 = vperm.xlu0 %441, %v329
      %v443 = vpop.permute.xlu0 %442
      %444 = vset.pattern.permute.xlu0 0
      %445 = vperm.xlu0 %444, %v330
      %v446 = vpop.permute.xlu0 %445
      %447 = vset.pattern.permute.xlu0 0
      %448 = vperm.xlu0 %447, %v331
      %v449 = vpop.permute.xlu0 %448
      %450 = vset.pattern.permute.xlu0 0
      %451 = vperm.xlu0 %450, %v332
      %v452 = vpop.permute.xlu0 %451
      %453 = vset.pattern.permute.xlu0 0
      %454 = vperm.xlu0 %453, %v333
      %v455 = vpop.permute.xlu0 %454
      %456 = vset.pattern.permute.xlu0 0
      %457 = vperm.xlu0 %456, %v334
      %v458 = vpop.permute.xlu0 %457
      %459 = vset.pattern.permute.xlu0 0
      %460 = vperm.xlu0 %459, %v335
      %v461 = vpop.permute.xlu0 %460
      %462 = vset.pattern.permute.xlu0 0
      %463 = vperm.xlu0 %462, %v336
      %v464 = vpop.permute.xlu0 %463
      %465 = vset.pattern.permute.xlu0 0
      %466 = vperm.xlu0 %465, %v337
      %v467 = vpop.permute.xlu0 %466
      %vm468 = vcmp.eq.s32.totalorder %v371, %v374
      %vm469 = vcmp.eq.s32.totalorder %v371, %v377
      %vm470 = vcmp.eq.s32.totalorder %v371, %v380
      %vm471 = vcmp.eq.s32.totalorder %v371, %v383
      %vm472 = vcmp.eq.s32.totalorder %v371, %v386
      %vm473 = vcmp.eq.s32.totalorder %v371, %v389
      %vm474 = vcmp.eq.s32.totalorder %v371, %v392
      %vm475 = vcmp.eq.s32.totalorder %v371, %v395
      %vm476 = vcmp.eq.s32.totalorder %v371, %v398
      %vm477 = vcmp.eq.s32.totalorder %v371, %v401
      %vm478 = vcmp.eq.s32.totalorder %v371, %v404
      %vm479 = vcmp.eq.s32.totalorder %v371, %v407
      %vm480 = vcmp.eq.s32.totalorder %v371, %v410
      %vm481 = vcmp.eq.s32.totalorder %v371, %v413
      %vm482 = vcmp.eq.s32.totalorder %v371, %v416
      %vm483 = vcmp.eq.s32.totalorder %v371, %v419
      %vm484 = vcmp.eq.s32.totalorder %v371, %v422
      %vm485 = vcmp.eq.s32.totalorder %v371, %v425
      %vm486 = vcmp.eq.s32.totalorder %v371, %v428
      %vm487 = vcmp.eq.s32.totalorder %v371, %v431
      %vm488 = vcmp.eq.s32.totalorder %v371, %v434
      %vm489 = vcmp.eq.s32.totalorder %v371, %v437
      %vm490 = vcmp.eq.s32.totalorder %v371, %v440
      %vm491 = vcmp.eq.s32.totalorder %v371, %v443
      %vm492 = vcmp.eq.s32.totalorder %v371, %v446
      %vm493 = vcmp.eq.s32.totalorder %v371, %v449
      %vm494 = vcmp.eq.s32.totalorder %v371, %v452
      %vm495 = vcmp.eq.s32.totalorder %v371, %v455
      %vm496 = vcmp.eq.s32.totalorder %v371, %v458
      %vm497 = vcmp.eq.s32.totalorder %v371, %v461
      %vm498 = vcmp.eq.s32.totalorder %v371, %v464
      %vm499 = vcmp.eq.s32.totalorder %v371, %v467
      %500 = vset.pattern.permute.xlu0 1
      %501 = vperm.xlu0 %500, %v338
      %v502 = vpop.permute.xlu0 %501
      %503 = vset.pattern.permute.xlu0 1
      %504 = vperm.xlu0 %503, %v339
      %v505 = vpop.permute.xlu0 %504
      %506 = vset.pattern.permute.xlu0 1
      %507 = vperm.xlu0 %506, %v340
      %v508 = vpop.permute.xlu0 %507
      %509 = vset.pattern.permute.xlu0 1
      %510 = vperm.xlu0 %509, %v341
      %v511 = vpop.permute.xlu0 %510
      %512 = vset.pattern.permute.xlu0 1
      %513 = vperm.xlu0 %512, %v342
      %v514 = vpop.permute.xlu0 %513
      %515 = vset.pattern.permute.xlu0 1
      %516 = vperm.xlu0 %515, %v343
      %v517 = vpop.permute.xlu0 %516
      %518 = vset.pattern.permute.xlu0 1
      %519 = vperm.xlu0 %518, %v344
      %v520 = vpop.permute.xlu0 %519
      %521 = vset.pattern.permute.xlu0 1
      %522 = vperm.xlu0 %521, %v345
      %v523 = vpop.permute.xlu0 %522
      %524 = vset.pattern.permute.xlu0 1
      %525 = vperm.xlu0 %524, %v346
      %v526 = vpop.permute.xlu0 %525
      %527 = vset.pattern.permute.xlu0 1
      %528 = vperm.xlu0 %527, %v347
      %v529 = vpop.permute.xlu0 %528
      %530 = vset.pattern.permute.xlu0 1
      %531 = vperm.xlu0 %530, %v348
      %v532 = vpop.permute.xlu0 %531
      %533 = vset.pattern.permute.xlu0 1
      %534 = vperm.xlu0 %533, %v349
      %v535 = vpop.permute.xlu0 %534
      %536 = vset.pattern.permute.xlu0 1
      %537 = vperm.xlu0 %536, %v350
      %v538 = vpop.permute.xlu0 %537
      %539 = vset.pattern.permute.xlu0 1
      %540 = vperm.xlu0 %539, %v351
      %v541 = vpop.permute.xlu0 %540
      %542 = vset.pattern.permute.xlu0 1
      %543 = vperm.xlu0 %542, %v352
      %v544 = vpop.permute.xlu0 %543
      %545 = vset.pattern.permute.xlu0 1
      %546 = vperm.xlu0 %545, %v353
      %v547 = vpop.permute.xlu0 %546
      %548 = vset.pattern.permute.xlu0 1
      %549 = vperm.xlu0 %548, %v354
      %v550 = vpop.permute.xlu0 %549
      %551 = vset.pattern.permute.xlu0 1
      %552 = vperm.xlu0 %551, %v355
      %v553 = vpop.permute.xlu0 %552
      %554 = vset.pattern.permute.xlu0 1
      %555 = vperm.xlu0 %554, %v356
      %v556 = vpop.permute.xlu0 %555
      %557 = vset.pattern.permute.xlu0 1
      %558 = vperm.xlu0 %557, %v357
      %v559 = vpop.permute.xlu0 %558
      %560 = vset.pattern.permute.xlu0 1
      %561 = vperm.xlu0 %560, %v358
      %v562 = vpop.permute.xlu0 %561
      %563 = vset.pattern.permute.xlu0 1
      %564 = vperm.xlu0 %563, %v359
      %v565 = vpop.permute.xlu0 %564
      %566 = vset.pattern.permute.xlu0 1
      %567 = vperm.xlu0 %566, %v360
      %v568 = vpop.permute.xlu0 %567
      %569 = vset.pattern.permute.xlu0 1
      %570 = vperm.xlu0 %569, %v361
      %v571 = vpop.permute.xlu0 %570
      %572 = vset.pattern.permute.xlu0 1
      %573 = vperm.xlu0 %572, %v362
      %v574 = vpop.permute.xlu0 %573
      %575 = vset.pattern.permute.xlu0 1
      %576 = vperm.xlu0 %575, %v363
      %v577 = vpop.permute.xlu0 %576
      %578 = vset.pattern.permute.xlu0 1
      %579 = vperm.xlu0 %578, %v364
      %v580 = vpop.permute.xlu0 %579
      %581 = vset.pattern.permute.xlu0 1
      %582 = vperm.xlu0 %581, %v365
      %v583 = vpop.permute.xlu0 %582
      %584 = vset.pattern.permute.xlu0 1
      %585 = vperm.xlu0 %584, %v366
      %v586 = vpop.permute.xlu0 %585
      %587 = vset.pattern.permute.xlu0 1
      %588 = vperm.xlu0 %587, %v367
      %v589 = vpop.permute.xlu0 %588
      %590 = vset.pattern.permute.xlu0 1
      %591 = vperm.xlu0 %590, %v368
      %v592 = vpop.permute.xlu0 %591
      %593 = vset.pattern.permute.xlu0 1
      %594 = vperm.xlu0 %593, %v369
      %v595 = vpop.permute.xlu0 %594
      %vm596 = vcmp.eq.s32.totalorder %v371, %v502
      %vm597 = vcmp.eq.s32.totalorder %v371, %v505
      %vm598 = vcmp.eq.s32.totalorder %v371, %v508
      %vm599 = vcmp.eq.s32.totalorder %v371, %v511
      %vm600 = vcmp.eq.s32.totalorder %v371, %v514
      %vm601 = vcmp.eq.s32.totalorder %v371, %v517
      %vm602 = vcmp.eq.s32.totalorder %v371, %v520
      %vm603 = vcmp.eq.s32.totalorder %v371, %v523
      %vm604 = vcmp.eq.s32.totalorder %v371, %v526
      %vm605 = vcmp.eq.s32.totalorder %v371, %v529
      %vm606 = vcmp.eq.s32.totalorder %v371, %v532
      %vm607 = vcmp.eq.s32.totalorder %v371, %v535
      %vm608 = vcmp.eq.s32.totalorder %v371, %v538
      %vm609 = vcmp.eq.s32.totalorder %v371, %v541
      %vm610 = vcmp.eq.s32.totalorder %v371, %v544
      %vm611 = vcmp.eq.s32.totalorder %v371, %v547
      %vm612 = vcmp.eq.s32.totalorder %v371, %v550
      %vm613 = vcmp.eq.s32.totalorder %v371, %v553
      %vm614 = vcmp.eq.s32.totalorder %v371, %v556
      %vm615 = vcmp.eq.s32.totalorder %v371, %v559
      %vm616 = vcmp.eq.s32.totalorder %v371, %v562
      %vm617 = vcmp.eq.s32.totalorder %v371, %v565
      %vm618 = vcmp.eq.s32.totalorder %v371, %v568
      %vm619 = vcmp.eq.s32.totalorder %v371, %v571
      %vm620 = vcmp.eq.s32.totalorder %v371, %v574
      %vm621 = vcmp.eq.s32.totalorder %v371, %v577
      %vm622 = vcmp.eq.s32.totalorder %v371, %v580
      %vm623 = vcmp.eq.s32.totalorder %v371, %v583
      %vm624 = vcmp.eq.s32.totalorder %v371, %v586
      %vm625 = vcmp.eq.s32.totalorder %v371, %v589
      %vm626 = vcmp.eq.s32.totalorder %v371, %v592
      %vm627 = vcmp.eq.s32.totalorder %v371, %v595
      %vm628 = vmor %vm468, %vm596
      %vm629 = vmor %vm469, %vm597
      %vm630 = vmor %vm470, %vm598
      %vm631 = vmor %vm471, %vm599
      %vm632 = vmor %vm472, %vm600
      %vm633 = vmor %vm473, %vm601
      %vm634 = vmor %vm474, %vm602
      %vm635 = vmor %vm475, %vm603
      %vm636 = vmor %vm476, %vm604
      %vm637 = vmor %vm477, %vm605
      %vm638 = vmor %vm478, %vm606
      %vm639 = vmor %vm479, %vm607
      %vm640 = vmor %vm480, %vm608
      %vm641 = vmor %vm481, %vm609
      %vm642 = vmor %vm482, %vm610
      %vm643 = vmor %vm483, %vm611
      %vm644 = vmor %vm484, %vm612
      %vm645 = vmor %vm485, %vm613
      %vm646 = vmor %vm486, %vm614
      %vm647 = vmor %vm487, %vm615
      %vm648 = vmor %vm488, %vm616
      %vm649 = vmor %vm489, %vm617
      %vm650 = vmor %vm490, %vm618
      %vm651 = vmor %vm491, %vm619
      %vm652 = vmor %vm492, %vm620
      %vm653 = vmor %vm493, %vm621
      %vm654 = vmor %vm494, %vm622
      %vm655 = vmor %vm495, %vm623
      %vm656 = vmor %vm496, %vm624
      %vm657 = vmor %vm497, %vm625
      %vm658 = vmor %vm498, %vm626
      %vm659 = vmor %vm499, %vm627
      %v660 = vsel %vm628, 1.0, 0.0
      %v661 = vsel %vm629, 1.0, 0.0
      %v662 = vsel %vm630, 1.0, 0.0
      %v663 = vsel %vm631, 1.0, 0.0
      %v664 = vsel %vm632, 1.0, 0.0
      %v665 = vsel %vm633, 1.0, 0.0
      %v666 = vsel %vm634, 1.0, 0.0
      %v667 = vsel %vm635, 1.0, 0.0
      %v668 = vsel %vm636, 1.0, 0.0
      %v669 = vsel %vm637, 1.0, 0.0
      %v670 = vsel %vm638, 1.0, 0.0
      %v671 = vsel %vm639, 1.0, 0.0
      %v672 = vsel %vm640, 1.0, 0.0
      %v673 = vsel %vm641, 1.0, 0.0
      %v674 = vsel %vm642, 1.0, 0.0
      %v675 = vsel %vm643, 1.0, 0.0
      %v676 = vsel %vm644, 1.0, 0.0
      %v677 = vsel %vm645, 1.0, 0.0
      %v678 = vsel %vm646, 1.0, 0.0
      %v679 = vsel %vm647, 1.0, 0.0
      %v680 = vsel %vm648, 1.0, 0.0
      %v681 = vsel %vm649, 1.0, 0.0
      %v682 = vsel %vm650, 1.0, 0.0
      %v683 = vsel %vm651, 1.0, 0.0
      %v684 = vsel %vm652, 1.0, 0.0
      %v685 = vsel %vm653, 1.0, 0.0
      %v686 = vsel %vm654, 1.0, 0.0
      %v687 = vsel %vm655, 1.0, 0.0
      %v688 = vsel %vm656, 1.0, 0.0
      %v689 = vsel %vm657, 1.0, 0.0
      %v690 = vsel %vm658, 1.0, 0.0
      %v691 = vsel %vm659, 1.0, 0.0
      %v692 = vpack.c.bf16 %v661, %v660
      %v693 = vpack.c.bf16 %v663, %v662
      %v694 = vpack.c.bf16 %v665, %v664
      %v695 = vpack.c.bf16 %v667, %v666
      %v696 = vpack.c.bf16 %v669, %v668
      %v697 = vpack.c.bf16 %v671, %v670
      %v698 = vpack.c.bf16 %v673, %v672
      %v699 = vpack.c.bf16 %v675, %v674
      %v700 = vpack.c.bf16 %v677, %v676
      %v701 = vpack.c.bf16 %v679, %v678
      %v702 = vpack.c.bf16 %v681, %v680
      %v703 = vpack.c.bf16 %v683, %v682
      %v704 = vpack.c.bf16 %v685, %v684
      %v705 = vpack.c.bf16 %v687, %v686
      %v706 = vpack.c.bf16 %v689, %v688
      %v707 = vpack.c.bf16 %v691, %v690
      %v708 = vld [vmem:[%s2] sm:$0xf]
      %v709 = vld [vmem:[%s2 + $0x4] sm:$0xf]
      %v710 = vld [vmem:[%s2 + $0x8] sm:$0xf]
      %v711 = vld [vmem:[%s2 + $0xc] sm:$0xf]
      %v712 = vld [vmem:[%s2 + $0x10] sm:$0xf]
      %v713 = vld [vmem:[%s2 + $0x14] sm:$0xf]
      %v714 = vld [vmem:[%s2 + $0x18] sm:$0xf]
      %v715 = vld [vmem:[%s2 + $0x1c] sm:$0xf]
      %v716 = vld [vmem:[%s2 + $0x20] sm:$0xf]
      %v717 = vld [vmem:[%s2 + $0x24] sm:$0xf]
      %v718 = vld [vmem:[%s2 + $0x28] sm:$0xf]
      %v719 = vld [vmem:[%s2 + $0x2c] sm:$0xf]
      %v720 = vld [vmem:[%s2 + $0x30] sm:$0xf]
      %v721 = vld [vmem:[%s2 + $0x34] sm:$0xf]
      %v722 = vld [vmem:[%s2 + $0x38] sm:$0xf]
      %v723 = vld [vmem:[%s2 + $0x3c] sm:$0xf]
      %v724 = vld [vmem:[%s297] sm:$0xff]
      %v725 = vld [vmem:[%s297 + $0x8] sm:$0xff]
      %v726 = vld [vmem:[%s297 + $0x10] sm:$0xff]
      %v727 = vld [vmem:[%s297 + $0x18] sm:$0xff]
      %v728 = vld [vmem:[%s297 + $0x20] sm:$0xff]
      %v729 = vld [vmem:[%s297 + $0x28] sm:$0xff]
      %v730 = vld [vmem:[%s297 + $0x30] sm:$0xff]
      %v731 = vld [vmem:[%s297 + $0x38] sm:$0xff]
      %v732 = vld [vmem:[%s297 + $0x40] sm:$0xff]
      %v733 = vld [vmem:[%s297 + $0x48] sm:$0xff]
      %v734 = vld [vmem:[%s297 + $0x50] sm:$0xff]
      %v735 = vld [vmem:[%s297 + $0x58] sm:$0xff]
      %v736 = vld [vmem:[%s297 + $0x60] sm:$0xff]
      %v737 = vld [vmem:[%s297 + $0x68] sm:$0xff]
      %v738 = vld [vmem:[%s297 + $0x70] sm:$0xff]
      %v739 = vld [vmem:[%s297 + $0x78] sm:$0xff]
      %v740 = vld [vmem:[%s297 + $0x80] sm:$0xff]
      %v741 = vld [vmem:[%s297 + $0x88] sm:$0xff]
      %v742 = vld [vmem:[%s297 + $0x90] sm:$0xff]
      %v743 = vld [vmem:[%s297 + $0x98] sm:$0xff]
      %v744 = vld [vmem:[%s297 + $0xa0] sm:$0xff]
      %v745 = vld [vmem:[%s297 + $0xa8] sm:$0xff]
      %v746 = vld [vmem:[%s297 + $0xb0] sm:$0xff]
      %v747 = vld [vmem:[%s297 + $0xb8] sm:$0xff]
      %v748 = vld [vmem:[%s297 + $0xc0] sm:$0xff]
      %v749 = vld [vmem:[%s297 + $0xc8] sm:$0xff]
      %v750 = vld [vmem:[%s297 + $0xd0] sm:$0xff]
      %v751 = vld [vmem:[%s297 + $0xd8] sm:$0xff]
      %v752 = vld [vmem:[%s297 + $0xe0] sm:$0xff]
      %v753 = vld [vmem:[%s297 + $0xe8] sm:$0xff]
      %v754 = vld [vmem:[%s297 + $0xf0] sm:$0xff]
      %v755 = vld [vmem:[%s297 + $0xf8] sm:$0xff]
      %v756 = vpack.c.bf16 %v725, %v724
      %v757 = vpack.c.bf16 %v727, %v726
      %v758 = vpack.c.bf16 %v729, %v728
      %v759 = vpack.c.bf16 %v731, %v730
      %v760 = vpack.c.bf16 %v733, %v732
      %v761 = vpack.c.bf16 %v735, %v734
      %v762 = vpack.c.bf16 %v737, %v736
      %v763 = vpack.c.bf16 %v739, %v738
      %v764 = vpack.c.bf16 %v741, %v740
      %v765 = vpack.c.bf16 %v743, %v742
      %v766 = vpack.c.bf16 %v745, %v744
      %v767 = vpack.c.bf16 %v747, %v746
      %v768 = vpack.c.bf16 %v749, %v748
      %v769 = vpack.c.bf16 %v751, %v750
      %v770 = vpack.c.bf16 %v753, %v752
      %v771 = vpack.c.bf16 %v755, %v754
      %v772 = vld [vmem:[%s3] sm:$0x3]
      %vm773 = vcmask 31744
      %v775 = vsel %vm773, %v756, 0
      %v778 = vsel %vm773, %v757, 0
      %v781 = vsel %vm773, %v758, 0
      %v784 = vsel %vm773, %v759, 0
      %v787 = vsel %vm773, %v760, 0
      %v790 = vsel %vm773, %v761, 0
      %v793 = vsel %vm773, %v762, 0
      %v796 = vsel %vm773, %v763, 0
      %v799 = vsel %vm773, %v764, 0
      %v802 = vsel %vm773, %v765, 0
      %v805 = vsel %vm773, %v766, 0
      %v808 = vsel %vm773, %v767, 0
      %v811 = vsel %vm773, %v768, 0
      %v814 = vsel %vm773, %v769, 0
      %v817 = vsel %vm773, %v770, 0
      %v820 = vsel %vm773, %v771, 0
      %vm822 = vcmask 1041408
      %v824 = vsel %vm822, %v772, 0
      %826 = vmatprep.subr.bf16.mxu0 0
      %827 = vmatpush1.bf16.msra.mxu0 %v824
      %828 = vmatprep.subr.bf16.mxu0 0
      %829 = vmatpush1.bf16.msra.mxu0 0
      %830 = vmatprep.subr.bf16.mxu0 0
      %831 = vmatpush1.bf16.msra.mxu0 0
      %832 = vmatprep.subr.bf16.mxu0 0
      %833 = vmatpush1.bf16.msra.mxu0 0
      %834 = vmatprep.subr.bf16.mxu0 0
      %835 = vmatpush1.bf16.msra.mxu0 0
      %836 = vmatprep.subr.bf16.mxu0 0
      %837 = vmatpush1.bf16.msra.mxu0 0
      %838 = vmatprep.subr.bf16.mxu0 0
      %839 = vmatpush1.bf16.msra.mxu0 0
      %840 = vmatprep.subr.bf16.mxu0 0
      %841 = vmatpush1.bf16.msra.mxu0 0
      %842 = vmatprep.subr.bf16.mxu0 0
      %843 = vmatpush1.bf16.msra.mxu0 0
      %844 = vmatprep.subr.bf16.mxu0 0
      %845 = vmatpush1.bf16.msra.mxu0 0
      %846 = vmatprep.subr.bf16.mxu0 0
      %847 = vmatpush1.bf16.msra.mxu0 0
      %848 = vmatprep.subr.bf16.mxu0 0
      %849 = vmatpush1.bf16.msra.mxu0 0
      %850 = vmatprep.subr.bf16.mxu0 0
      %851 = vmatpush1.bf16.msra.mxu0 0
      %852 = vmatprep.subr.bf16.mxu0 0
      %853 = vmatpush1.bf16.msra.mxu0 0
      %854 = vmatprep.subr.bf16.mxu0 0
      %855 = vmatpush1.bf16.msra.mxu0 0
      %856 = vmatprep.subr.bf16.mxu0 0
      %857 = vmatpush1.bf16.msra.mxu0 0
      %858 = vmatprep.mubr.bf16.mxu0 0
      %859 = vmatmul.mubr.bf16.gmra.mrb[0].mxu0 %v775
      %v860 = vpop.f32.mrb[0].mxu0
      %v861 = vadd.f32 0.0, %v860
      %v862 = vpop.f32.mrb[0].mxu0
      %v863 = vpop.f32.mrb[0].mxu0
      %v864 = vadd.f32 0.0, %v863
      %v865 = vpop.f32.mrb[0].mxu0
      %866 = vmatprep.mubr.bf16.mxu0 0
      %867 = vmatmul.mubr.bf16.gmra.mrb[0].mxu0 %v778
      %v868 = vpop.f32.mrb[0].mxu0
      %v869 = vadd.f32 0.0, %v868
      %v870 = vpop.f32.mrb[0].mxu0
      %v871 = vpop.f32.mrb[0].mxu0
      %v872 = vadd.f32 0.0, %v871
      %v873 = vpop.f32.mrb[0].mxu0
      %874 = vmatprep.mubr.bf16.mxu0 0
      %875 = vmatmul.mubr.bf16.gmra.mrb[0].mxu0 %v781
      %v876 = vpop.f32.mrb[0].mxu0
      %v877 = vadd.f32 0.0, %v876
      %v878 = vpop.f32.mrb[0].mxu0
      %v879 = vpop.f32.mrb[0].mxu0
      %v880 = vadd.f32 0.0, %v879
      %v881 = vpop.f32.mrb[0].mxu0
      %882 = vmatprep.mubr.bf16.mxu0 0
      %883 = vmatmul.mubr.bf16.gmra.mrb[0].mxu0 %v784
      %v884 = vpop.f32.mrb[0].mxu0
      %v885 = vadd.f32 0.0, %v884
      %v886 = vpop.f32.mrb[0].mxu0
      %v887 = vpop.f32.mrb[0].mxu0
      %v888 = vadd.f32 0.0, %v887
      %v889 = vpop.f32.mrb[0].mxu0
      %890 = vmatprep.mubr.bf16.mxu0 0
      %891 = vmatmul.mubr.bf16.gmra.mrb[0].mxu0 %v787
      %v892 = vpop.f32.mrb[0].mxu0
      %v893 = vadd.f32 0.0, %v892
      %v894 = vpop.f32.mrb[0].mxu0
      %v895 = vpop.f32.mrb[0].mxu0
      %v896 = vadd.f32 0.0, %v895
      %v897 = vpop.f32.mrb[0].mxu0
      %898 = vmatprep.mubr.bf16.mxu0 0
      %899 = vmatmul.mubr.bf16.gmra.mrb[0].mxu0 %v790
      %v900 = vpop.f32.mrb[0].mxu0
      %v901 = vadd.f32 0.0, %v900
      %v902 = vpop.f32.mrb[0].mxu0
      %v903 = vpop.f32.mrb[0].mxu0
      %v904 = vadd.f32 0.0, %v903
      %v905 = vpop.f32.mrb[0].mxu0
      %906 = vmatprep.mubr.bf16.mxu0 0
      %907 = vmatmul.mubr.bf16.gmra.mrb[0].mxu0 %v793
      %v908 = vpop.f32.mrb[0].mxu0
      %v909 = vadd.f32 0.0, %v908
      %v910 = vpop.f32.mrb[0].mxu0
      %v911 = vpop.f32.mrb[0].mxu0
      %v912 = vadd.f32 0.0, %v911
      %v913 = vpop.f32.mrb[0].mxu0
      %914 = vmatprep.mubr.bf16.mxu0 0
      %915 = vmatmul.mubr.bf16.gmra.mrb[0].mxu0 %v796
      %v916 = vpop.f32.mrb[0].mxu0
      %v917 = vadd.f32 0.0, %v916
      %v918 = vpop.f32.mrb[0].mxu0
      %v919 = vpop.f32.mrb[0].mxu0
      %v920 = vadd.f32 0.0, %v919
      %v921 = vpop.f32.mrb[0].mxu0
      %922 = vmatprep.mubr.bf16.mxu0 0
      %923 = vmatmul.mubr.bf16.gmra.mrb[0].mxu0 %v799
      %v924 = vpop.f32.mrb[0].mxu0
      %v925 = vadd.f32 0.0, %v924
      %v926 = vpop.f32.mrb[0].mxu0
      %v927 = vpop.f32.mrb[0].mxu0
      %v928 = vadd.f32 0.0, %v927
      %v929 = vpop.f32.mrb[0].mxu0
      %930 = vmatprep.mubr.bf16.mxu0 0
      %931 = vmatmul.mubr.bf16.gmra.mrb[0].mxu0 %v802
      %v932 = vpop.f32.mrb[0].mxu0
      %v933 = vadd.f32 0.0, %v932
      %v934 = vpop.f32.mrb[0].mxu0
      %v935 = vpop.f32.mrb[0].mxu0
      %v936 = vadd.f32 0.0, %v935
      %v937 = vpop.f32.mrb[0].mxu0
      %938 = vmatprep.mubr.bf16.mxu0 0
      %939 = vmatmul.mubr.bf16.gmra.mrb[0].mxu0 %v805
      %v940 = vpop.f32.mrb[0].mxu0
      %v941 = vadd.f32 0.0, %v940
      %v942 = vpop.f32.mrb[0].mxu0
      %v943 = vpop.f32.mrb[0].mxu0
      %v944 = vadd.f32 0.0, %v943
      %v945 = vpop.f32.mrb[0].mxu0
      %946 = vmatprep.mubr.bf16.mxu0 0
      %947 = vmatmul.mubr.bf16.gmra.mrb[0].mxu0 %v808
      %v948 = vpop.f32.mrb[0].mxu0
      %v949 = vadd.f32 0.0, %v948
      %v950 = vpop.f32.mrb[0].mxu0
      %v951 = vpop.f32.mrb[0].mxu0
      %v952 = vadd.f32 0.0, %v951
      %v953 = vpop.f32.mrb[0].mxu0
      %954 = vmatprep.mubr.bf16.mxu0 0
      %955 = vmatmul.mubr.bf16.gmra.mrb[0].mxu0 %v811
      %v956 = vpop.f32.mrb[0].mxu0
      %v957 = vadd.f32 0.0, %v956
      %v958 = vpop.f32.mrb[0].mxu0
      %v959 = vpop.f32.mrb[0].mxu0
      %v960 = vadd.f32 0.0, %v959
      %v961 = vpop.f32.mrb[0].mxu0
      %962 = vmatprep.mubr.bf16.mxu0 0
      %963 = vmatmul.mubr.bf16.gmra.mrb[0].mxu0 %v814
      %v964 = vpop.f32.mrb[0].mxu0
      %v965 = vadd.f32 0.0, %v964
      %v966 = vpop.f32.mrb[0].mxu0
      %v967 = vpop.f32.mrb[0].mxu0
      %v968 = vadd.f32 0.0, %v967
      %v969 = vpop.f32.mrb[0].mxu0
      %970 = vmatprep.mubr.bf16.mxu0 0
      %971 = vmatmul.mubr.bf16.gmra.mrb[0].mxu0 %v817
      %v972 = vpop.f32.mrb[0].mxu0
      %v973 = vadd.f32 0.0, %v972
      %v974 = vpop.f32.mrb[0].mxu0
      %v975 = vpop.f32.mrb[0].mxu0
      %v976 = vadd.f32 0.0, %v975
      %v977 = vpop.f32.mrb[0].mxu0
      %978 = vmatprep.mubr.bf16.mxu0 0
      %979 = vmatmul.mubr.bf16.gmra.mrb[0].mxu0 %v820
      %v980 = vpop.f32.mrb[0].mxu0
      %v981 = vadd.f32 0.0, %v980
      %v982 = vpop.f32.mrb[0].mxu0
      %v983 = vpop.f32.mrb[0].mxu0
      %v984 = vadd.f32 0.0, %v983
      %v985 = vpop.f32.mrb[0].mxu0
      %986 = vdwg.mxu0
      %v1003 = vunpack.c.l.b16 %v708
      %v1004 = vunpack.c.l.b16 %v709
      %v1005 = vunpack.c.l.b16 %v710
      %v1006 = vunpack.c.l.b16 %v711
      %v1007 = vunpack.c.l.b16 %v712
      %v1008 = vunpack.c.l.b16 %v713
      %v1009 = vunpack.c.l.b16 %v714
      %v1010 = vunpack.c.l.b16 %v715
      %v1011 = vunpack.c.l.b16 %v716
      %v1012 = vunpack.c.l.b16 %v717
      %v1013 = vunpack.c.l.b16 %v718
      %v1014 = vunpack.c.l.b16 %v719
      %v1015 = vunpack.c.l.b16 %v720
      %v1016 = vunpack.c.l.b16 %v721
      %v1017 = vunpack.c.l.b16 %v722
      %v1018 = vunpack.c.l.b16 %v723
      %v1019 = vpack.c.b16 %v1004, %v1003
      %v1020 = vpack.c.b16 %v1006, %v1005
      %v1021 = vpack.c.b16 %v1008, %v1007
      %v1022 = vpack.c.b16 %v1010, %v1009
      %v1023 = vpack.c.b16 %v1012, %v1011
      %v1024 = vpack.c.b16 %v1014, %v1013
      %v1025 = vpack.c.b16 %v1016, %v1015
      %v1026 = vpack.c.b16 %v1018, %v1017
      %1035 = vmatprep.subr.bf16.mxu0 0
      %1036 = vmatpush1.bf16.msra.mxu0 %v1019
      %1037 = vmatprep.subr.bf16.mxu0 0
      %1038 = vmatpush1.bf16.msra.mxu0 %v1020
      %1039 = vmatprep.subr.bf16.mxu0 0
      %1040 = vmatpush1.bf16.msra.mxu0 %v1021
      %1041 = vmatprep.subr.bf16.mxu0 0
      %1042 = vmatpush1.bf16.msra.mxu0 %v1022
      %1043 = vmatprep.subr.bf16.mxu0 0
      %1044 = vmatpush1.bf16.msra.mxu0 %v1023
      %1045 = vmatprep.subr.bf16.mxu0 0
      %1046 = vmatpush1.bf16.msra.mxu0 %v1024
      %1047 = vmatprep.subr.bf16.mxu0 0
      %1048 = vmatpush1.bf16.msra.mxu0 %v1025
      %1049 = vmatprep.subr.bf16.mxu0 0
      %1050 = vmatpush1.bf16.msra.mxu0 %v1026
      %1051 = vmatprep.subr.bf16.mxu0 0
      %1052 = vmatpush1.bf16.msra.mxu0 0
      %1053 = vmatprep.subr.bf16.mxu0 0
      %1054 = vmatpush1.bf16.msra.mxu0 0
      %1055 = vmatprep.subr.bf16.mxu0 0
      %1056 = vmatpush1.bf16.msra.mxu0 0
      %1057 = vmatprep.subr.bf16.mxu0 0
      %1058 = vmatpush1.bf16.msra.mxu0 0
      %1059 = vmatprep.subr.bf16.mxu0 0
      %1060 = vmatpush1.bf16.msra.mxu0 0
      %1061 = vmatprep.subr.bf16.mxu0 0
      %1062 = vmatpush1.bf16.msra.mxu0 0
      %1063 = vmatprep.subr.bf16.mxu0 0
      %1064 = vmatpush1.bf16.msra.mxu0 0
      %1065 = vmatprep.subr.bf16.mxu0 0
      %1066 = vmatpush1.bf16.msra.mxu0 0
      %1067 = vmatprep.mubr.bf16.mxu0 0
      %1068 = vmatmul.mubr.bf16.gmra.mrb[0].mxu0 %v692
      %v1069 = vpop.f32.mrb[0].mxu0
      %v1070 = vadd.f32 %v861, %v1069
      %v1071 = vpop.f32.mrb[0].mxu0
      %v1072 = vpop.f32.mrb[0].mxu0
      %v1073 = vadd.f32 %v864, %v1072
      %v1074 = vpop.f32.mrb[0].mxu0
      %1075 = vmatprep.mubr.bf16.mxu0 0
      %1076 = vmatmul.mubr.bf16.gmra.mrb[0].mxu0 %v693
      %v1077 = vpop.f32.mrb[0].mxu0
      %v1078 = vadd.f32 %v869, %v1077
      %v1079 = vpop.f32.mrb[0].mxu0
      %v1080 = vpop.f32.mrb[0].mxu0
      %v1081 = vadd.f32 %v872, %v1080
      %v1082 = vpop.f32.mrb[0].mxu0
      %1083 = vmatprep.mubr.bf16.mxu0 0
      %1084 = vmatmul.mubr.bf16.gmra.mrb[0].mxu0 %v694
      %v1085 = vpop.f32.mrb[0].mxu0
      %v1086 = vadd.f32 %v877, %v1085
      %v1087 = vpop.f32.mrb[0].mxu0
      %v1088 = vpop.f32.mrb[0].mxu0
      %v1089 = vadd.f32 %v880, %v1088
      %v1090 = vpop.f32.mrb[0].mxu0
      %1091 = vmatprep.mubr.bf16.mxu0 0
      %1092 = vmatmul.mubr.bf16.gmra.mrb[0].mxu0 %v695
      %v1093 = vpop.f32.mrb[0].mxu0
      %v1094 = vadd.f32 %v885, %v1093
      %v1095 = vpop.f32.mrb[0].mxu0
      %v1096 = vpop.f32.mrb[0].mxu0
      %v1097 = vadd.f32 %v888, %v1096
      %v1098 = vpop.f32.mrb[0].mxu0
      %1099 = vmatprep.mubr.bf16.mxu0 0
      %1100 = vmatmul.mubr.bf16.gmra.mrb[0].mxu0 %v696
      %v1101 = vpop.f32.mrb[0].mxu0
      %v1102 = vadd.f32 %v893, %v1101
      %v1103 = vpop.f32.mrb[0].mxu0
      %v1104 = vpop.f32.mrb[0].mxu0
      %v1105 = vadd.f32 %v896, %v1104
      %v1106 = vpop.f32.mrb[0].mxu0
      %1107 = vmatprep.mubr.bf16.mxu0 0
      %1108 = vmatmul.mubr.bf16.gmra.mrb[0].mxu0 %v697
      %v1109 = vpop.f32.mrb[0].mxu0
      %v1110 = vadd.f32 %v901, %v1109
      %v1111 = vpop.f32.mrb[0].mxu0
      %v1112 = vpop.f32.mrb[0].mxu0
      %v1113 = vadd.f32 %v904, %v1112
      %v1114 = vpop.f32.mrb[0].mxu0
      %1115 = vmatprep.mubr.bf16.mxu0 0
      %1116 = vmatmul.mubr.bf16.gmra.mrb[0].mxu0 %v698
      %v1117 = vpop.f32.mrb[0].mxu0
      %v1118 = vadd.f32 %v909, %v1117
      %v1119 = vpop.f32.mrb[0].mxu0
      %v1120 = vpop.f32.mrb[0].mxu0
      %v1121 = vadd.f32 %v912, %v1120
      %v1122 = vpop.f32.mrb[0].mxu0
      %1123 = vmatprep.mubr.bf16.mxu0 0
      %1124 = vmatmul.mubr.bf16.gmra.mrb[0].mxu0 %v699
      %v1125 = vpop.f32.mrb[0].mxu0
      %v1126 = vadd.f32 %v917, %v1125
      %v1127 = vpop.f32.mrb[0].mxu0
      %v1128 = vpop.f32.mrb[0].mxu0
      %v1129 = vadd.f32 %v920, %v1128
      %v1130 = vpop.f32.mrb[0].mxu0
      %1131 = vmatprep.mubr.bf16.mxu0 0
      %1132 = vmatmul.mubr.bf16.gmra.mrb[0].mxu0 %v700
      %v1133 = vpop.f32.mrb[0].mxu0
      %v1134 = vadd.f32 %v925, %v1133
      %v1135 = vpop.f32.mrb[0].mxu0
      %v1136 = vpop.f32.mrb[0].mxu0
      %v1137 = vadd.f32 %v928, %v1136
      %v1138 = vpop.f32.mrb[0].mxu0
      %1139 = vmatprep.mubr.bf16.mxu0 0
      %1140 = vmatmul.mubr.bf16.gmra.mrb[0].mxu0 %v701
      %v1141 = vpop.f32.mrb[0].mxu0
      %v1142 = vadd.f32 %v933, %v1141
      %v1143 = vpop.f32.mrb[0].mxu0
      %v1144 = vpop.f32.mrb[0].mxu0
      %v1145 = vadd.f32 %v936, %v1144
      %v1146 = vpop.f32.mrb[0].mxu0
      %1147 = vmatprep.mubr.bf16.mxu0 0
      %1148 = vmatmul.mubr.bf16.gmra.mrb[0].mxu0 %v702
      %v1149 = vpop.f32.mrb[0].mxu0
      %v1150 = vadd.f32 %v941, %v1149
      %v1151 = vpop.f32.mrb[0].mxu0
      %v1152 = vpop.f32.mrb[0].mxu0
      %v1153 = vadd.f32 %v944, %v1152
      %v1154 = vpop.f32.mrb[0].mxu0
      %1155 = vmatprep.mubr.bf16.mxu0 0
      %1156 = vmatmul.mubr.bf16.gmra.mrb[0].mxu0 %v703
      %v1157 = vpop.f32.mrb[0].mxu0
      %v1158 = vadd.f32 %v949, %v1157
      %v1159 = vpop.f32.mrb[0].mxu0
      %v1160 = vpop.f32.mrb[0].mxu0
      %v1161 = vadd.f32 %v952, %v1160
      %v1162 = vpop.f32.mrb[0].mxu0
      %1163 = vmatprep.mubr.bf16.mxu0 0
      %1164 = vmatmul.mubr.bf16.gmra.mrb[0].mxu0 %v704
      %v1165 = vpop.f32.mrb[0].mxu0
      %v1166 = vadd.f32 %v957, %v1165
      %v1167 = vpop.f32.mrb[0].mxu0
      %v1168 = vpop.f32.mrb[0].mxu0
      %v1169 = vadd.f32 %v960, %v1168
      %v1170 = vpop.f32.mrb[0].mxu0
      %1171 = vmatprep.mubr.bf16.mxu0 0
      %1172 = vmatmul.mubr.bf16.gmra.mrb[0].mxu0 %v705
      %v1173 = vpop.f32.mrb[0].mxu0
      %v1174 = vadd.f32 %v965, %v1173
      %v1175 = vpop.f32.mrb[0].mxu0
      %v1176 = vpop.f32.mrb[0].mxu0
      %v1177 = vadd.f32 %v968, %v1176
      %v1178 = vpop.f32.mrb[0].mxu0
      %1179 = vmatprep.mubr.bf16.mxu0 0
      %1180 = vmatmul.mubr.bf16.gmra.mrb[0].mxu0 %v706
      %v1181 = vpop.f32.mrb[0].mxu0
      %v1182 = vadd.f32 %v973, %v1181
      %v1183 = vpop.f32.mrb[0].mxu0
      %v1184 = vpop.f32.mrb[0].mxu0
      %v1185 = vadd.f32 %v976, %v1184
      %v1186 = vpop.f32.mrb[0].mxu0
      %1187 = vmatprep.mubr.bf16.mxu0 0
      %1188 = vmatmul.mubr.bf16.gmra.mrb[0].mxu0 %v707
      %v1189 = vpop.f32.mrb[0].mxu0
      %v1190 = vadd.f32 %v981, %v1189
      %v1191 = vpop.f32.mrb[0].mxu0
      %v1192 = vpop.f32.mrb[0].mxu0
      %v1193 = vadd.f32 %v984, %v1192
      %v1194 = vpop.f32.mrb[0].mxu0
      %1195 = vdwg.mxu0
      %v1196 = vld [vmem:[%s4] sm:$0x1]
      %v1198 = vlaneseq
      %v1199 = vshrl.u32 %v1198, 7
      %v1200 = vsub.s32 0, %v1199
      %v1201 = vrot.slane %v1196, %v1200
      %v1203 = vadd.f32 %v1070, %v1201
      %v1204 = vadd.f32 %v1073, %v1201
      %v1205 = vadd.f32 %v1078, %v1201
      %v1206 = vadd.f32 %v1081, %v1201
      %v1207 = vadd.f32 %v1086, %v1201
      %v1208 = vadd.f32 %v1089, %v1201
      %v1209 = vadd.f32 %v1094, %v1201
      %v1210 = vadd.f32 %v1097, %v1201
      %v1211 = vadd.f32 %v1102, %v1201
      %v1212 = vadd.f32 %v1105, %v1201
      %v1213 = vadd.f32 %v1110, %v1201
      %v1214 = vadd.f32 %v1113, %v1201
      %v1215 = vadd.f32 %v1118, %v1201
      %v1216 = vadd.f32 %v1121, %v1201
      %v1217 = vadd.f32 %v1126, %v1201
      %v1218 = vadd.f32 %v1129, %v1201
      %v1219 = vadd.f32 %v1134, %v1201
      %v1220 = vadd.f32 %v1137, %v1201
      %v1221 = vadd.f32 %v1142, %v1201
      %v1222 = vadd.f32 %v1145, %v1201
      %v1223 = vadd.f32 %v1150, %v1201
      %v1224 = vadd.f32 %v1153, %v1201
      %v1225 = vadd.f32 %v1158, %v1201
      %v1226 = vadd.f32 %v1161, %v1201
      %v1227 = vadd.f32 %v1166, %v1201
      %v1228 = vadd.f32 %v1169, %v1201
      %v1229 = vadd.f32 %v1174, %v1201
      %v1230 = vadd.f32 %v1177, %v1201
      %v1231 = vadd.f32 %v1182, %v1201
      %v1232 = vadd.f32 %v1185, %v1201
      %v1233 = vadd.f32 %v1190, %v1201
      %v1234 = vadd.f32 %v1193, %v1201
      %v1235 = vmax.f32 %v1203, 0.0
      %v1236 = vmax.f32 %v1204, 0.0
      %v1237 = vmax.f32 %v1205, 0.0
      %v1238 = vmax.f32 %v1206, 0.0
      %v1239 = vmax.f32 %v1207, 0.0
      %v1240 = vmax.f32 %v1208, 0.0
      %v1241 = vmax.f32 %v1209, 0.0
      %v1242 = vmax.f32 %v1210, 0.0
      %v1243 = vmax.f32 %v1211, 0.0
      %v1244 = vmax.f32 %v1212, 0.0
      %v1245 = vmax.f32 %v1213, 0.0
      %v1246 = vmax.f32 %v1214, 0.0
      %v1247 = vmax.f32 %v1215, 0.0
      %v1248 = vmax.f32 %v1216, 0.0
      %v1249 = vmax.f32 %v1217, 0.0
      %v1250 = vmax.f32 %v1218, 0.0
      %v1251 = vmax.f32 %v1219, 0.0
      %v1252 = vmax.f32 %v1220, 0.0
      %v1253 = vmax.f32 %v1221, 0.0
      %v1254 = vmax.f32 %v1222, 0.0
      %v1255 = vmax.f32 %v1223, 0.0
      %v1256 = vmax.f32 %v1224, 0.0
      %v1257 = vmax.f32 %v1225, 0.0
      %v1258 = vmax.f32 %v1226, 0.0
      %v1259 = vmax.f32 %v1227, 0.0
      %v1260 = vmax.f32 %v1228, 0.0
      %v1261 = vmax.f32 %v1229, 0.0
      %v1262 = vmax.f32 %v1230, 0.0
      %v1263 = vmax.f32 %v1231, 0.0
      %v1264 = vmax.f32 %v1232, 0.0
      %v1265 = vmax.f32 %v1233, 0.0
      %v1266 = vmax.f32 %v1234, 0.0
      %v1267 = vld [vmem:[%s5] sm:$0x1]
      %v1268 = vunpack.c.l.bf16 %v1267
      %v1269 = vlaneseq
      %v1270 = vshrl.u32 %v1269, 7
      %v1271 = vsub.s32 0, %v1270
      %v1272 = vrot.slane %v1268, %v1271
      %v1273 = vmul.f32 %v1235, %v1272
      %v1274 = vmul.f32 %v1236, %v1272
      %v1275 = vmul.f32 %v1237, %v1272
      %v1276 = vmul.f32 %v1238, %v1272
      %v1277 = vmul.f32 %v1239, %v1272
      %v1278 = vmul.f32 %v1240, %v1272
      %v1279 = vmul.f32 %v1241, %v1272
      %v1280 = vmul.f32 %v1242, %v1272
      %v1281 = vmul.f32 %v1243, %v1272
      %v1282 = vmul.f32 %v1244, %v1272
      %v1283 = vmul.f32 %v1245, %v1272
      %v1284 = vmul.f32 %v1246, %v1272
      %v1285 = vmul.f32 %v1247, %v1272
      %v1286 = vmul.f32 %v1248, %v1272
      %v1287 = vmul.f32 %v1249, %v1272
      %v1288 = vmul.f32 %v1250, %v1272
      %v1289 = vmul.f32 %v1251, %v1272
      %v1290 = vmul.f32 %v1252, %v1272
      %v1291 = vmul.f32 %v1253, %v1272
      %v1292 = vmul.f32 %v1254, %v1272
      %v1293 = vmul.f32 %v1255, %v1272
      %v1294 = vmul.f32 %v1256, %v1272
      %v1295 = vmul.f32 %v1257, %v1272
      %v1296 = vmul.f32 %v1258, %v1272
      %v1297 = vmul.f32 %v1259, %v1272
      %v1298 = vmul.f32 %v1260, %v1272
      %v1299 = vmul.f32 %v1261, %v1272
      %v1300 = vmul.f32 %v1262, %v1272
      %v1301 = vmul.f32 %v1263, %v1272
      %v1302 = vmul.f32 %v1264, %v1272
      %v1303 = vmul.f32 %v1265, %v1272
      %v1304 = vmul.f32 %v1266, %v1272
      %1305 = vadd.xlane.f32.xlu0 %v1273
      %v1306 = vpop.xlane.xlu0 %1305
      %1307 = vadd.xlane.f32.xlu0 %v1274
      %v1308 = vpop.xlane.xlu0 %1307
      %1309 = vadd.xlane.f32.xlu0 %v1275
      %v1310 = vpop.xlane.xlu0 %1309
      %1311 = vadd.xlane.f32.xlu0 %v1276
      %v1312 = vpop.xlane.xlu0 %1311
      %1313 = vadd.xlane.f32.xlu0 %v1277
      %v1314 = vpop.xlane.xlu0 %1313
      %1315 = vadd.xlane.f32.xlu0 %v1278
      %v1316 = vpop.xlane.xlu0 %1315
      %1317 = vadd.xlane.f32.xlu0 %v1279
      %v1318 = vpop.xlane.xlu0 %1317
      %1319 = vadd.xlane.f32.xlu0 %v1280
      %v1320 = vpop.xlane.xlu0 %1319
      %1321 = vadd.xlane.f32.xlu0 %v1281
      %v1322 = vpop.xlane.xlu0 %1321
      %1323 = vadd.xlane.f32.xlu0 %v1282
      %v1324 = vpop.xlane.xlu0 %1323
      %1325 = vadd.xlane.f32.xlu0 %v1283
      %v1326 = vpop.xlane.xlu0 %1325
      %1327 = vadd.xlane.f32.xlu0 %v1284
      %v1328 = vpop.xlane.xlu0 %1327
      %1329 = vadd.xlane.f32.xlu0 %v1285
      %v1330 = vpop.xlane.xlu0 %1329
      %1331 = vadd.xlane.f32.xlu0 %v1286
      %v1332 = vpop.xlane.xlu0 %1331
      %1333 = vadd.xlane.f32.xlu0 %v1287
      %v1334 = vpop.xlane.xlu0 %1333
      %1335 = vadd.xlane.f32.xlu0 %v1288
      %v1336 = vpop.xlane.xlu0 %1335
      %1337 = vadd.xlane.f32.xlu0 %v1289
      %v1338 = vpop.xlane.xlu0 %1337
      %1339 = vadd.xlane.f32.xlu0 %v1290
      %v1340 = vpop.xlane.xlu0 %1339
      %1341 = vadd.xlane.f32.xlu0 %v1291
      %v1342 = vpop.xlane.xlu0 %1341
      %1343 = vadd.xlane.f32.xlu0 %v1292
      %v1344 = vpop.xlane.xlu0 %1343
      %1345 = vadd.xlane.f32.xlu0 %v1293
      %v1346 = vpop.xlane.xlu0 %1345
      %1347 = vadd.xlane.f32.xlu0 %v1294
      %v1348 = vpop.xlane.xlu0 %1347
      %1349 = vadd.xlane.f32.xlu0 %v1295
      %v1350 = vpop.xlane.xlu0 %1349
      %1351 = vadd.xlane.f32.xlu0 %v1296
      %v1352 = vpop.xlane.xlu0 %1351
      %1353 = vadd.xlane.f32.xlu0 %v1297
      %v1354 = vpop.xlane.xlu0 %1353
      %1355 = vadd.xlane.f32.xlu0 %v1298
      %v1356 = vpop.xlane.xlu0 %1355
      %1357 = vadd.xlane.f32.xlu0 %v1299
      %v1358 = vpop.xlane.xlu0 %1357
      %1359 = vadd.xlane.f32.xlu0 %v1300
      %v1360 = vpop.xlane.xlu0 %1359
      %1361 = vadd.xlane.f32.xlu0 %v1301
      %v1362 = vpop.xlane.xlu0 %1361
      %1363 = vadd.xlane.f32.xlu0 %v1302
      %v1364 = vpop.xlane.xlu0 %1363
      %1365 = vadd.xlane.f32.xlu0 %v1303
      %v1366 = vpop.xlane.xlu0 %1365
      %1367 = vadd.xlane.f32.xlu0 %v1304
      %v1368 = vpop.xlane.xlu0 %1367
      %s1369 = sld [smem:[#allocation2]]
      %v1370 = vstv %s1369
      %v1371 = vadd.f32 %v1306, %v1370
      %v1372 = vadd.f32 %v1308, %v1370
      %v1373 = vadd.f32 %v1310, %v1370
      %v1374 = vadd.f32 %v1312, %v1370
      %v1375 = vadd.f32 %v1314, %v1370
      %v1376 = vadd.f32 %v1316, %v1370
      %v1377 = vadd.f32 %v1318, %v1370
      %v1378 = vadd.f32 %v1320, %v1370
      %v1379 = vadd.f32 %v1322, %v1370
      %v1380 = vadd.f32 %v1324, %v1370
      %v1381 = vadd.f32 %v1326, %v1370
      %v1382 = vadd.f32 %v1328, %v1370
      %v1383 = vadd.f32 %v1330, %v1370
      %v1384 = vadd.f32 %v1332, %v1370
      %v1385 = vadd.f32 %v1334, %v1370
      %v1386 = vadd.f32 %v1336, %v1370
      %v1387 = vadd.f32 %v1338, %v1370
      %v1388 = vadd.f32 %v1340, %v1370
      %v1389 = vadd.f32 %v1342, %v1370
      %v1390 = vadd.f32 %v1344, %v1370
      %v1391 = vadd.f32 %v1346, %v1370
      %v1392 = vadd.f32 %v1348, %v1370
      %v1393 = vadd.f32 %v1350, %v1370
      %v1394 = vadd.f32 %v1352, %v1370
      %v1395 = vadd.f32 %v1354, %v1370
      %v1396 = vadd.f32 %v1356, %v1370
      %v1397 = vadd.f32 %v1358, %v1370
      %v1398 = vadd.f32 %v1360, %v1370
      %v1399 = vadd.f32 %v1362, %v1370
      %v1400 = vadd.f32 %v1364, %v1370
      %v1401 = vadd.f32 %v1366, %v1370
      %v1402 = vadd.f32 %v1368, %v1370
      %vm1403 = vcmask 7168
      %1404 = vst.msk [vmem:[%s303] sm:$0xff] %vm1403, %v1371
      %1405 = vst.msk [vmem:[%s303 + $0x8] sm:$0xff] %vm1403, %v1372
      %1406 = vst.msk [vmem:[%s303 + $0x10] sm:$0xff] %vm1403, %v1373
      %1407 = vst.msk [vmem:[%s303 + $0x18] sm:$0xff] %vm1403, %v1374
      %1408 = vst.msk [vmem:[%s303 + $0x20] sm:$0xff] %vm1403, %v1375
      %1409 = vst.msk [vmem:[%s303 + $0x28] sm:$0xff] %vm1403, %v1376
      %1410 = vst.msk [vmem:[%s303 + $0x30] sm:$0xff] %vm1403, %v1377
      %1411 = vst.msk [vmem:[%s303 + $0x38] sm:$0xff] %vm1403, %v1378
      %1412 = vst.msk [vmem:[%s303 + $0x40] sm:$0xff] %vm1403, %v1379
      %1413 = vst.msk [vmem:[%s303 + $0x48] sm:$0xff] %vm1403, %v1380
      %1414 = vst.msk [vmem:[%s303 + $0x50] sm:$0xff] %vm1403, %v1381
      %1415 = vst.msk [vmem:[%s303 + $0x58] sm:$0xff] %vm1403, %v1382
      %1416 = vst.msk [vmem:[%s303 + $0x60] sm:$0xff] %vm1403, %v1383
      %1417 = vst.msk [vmem:[%s303 + $0x68] sm:$0xff] %vm1403, %v1384
      %1418 = vst.msk [vmem:[%s303 + $0x70] sm:$0xff] %vm1403, %v1385
      %1419 = vst.msk [vmem:[%s303 + $0x78] sm:$0xff] %vm1403, %v1386
      %1420 = vst.msk [vmem:[%s303 + $0x80] sm:$0xff] %vm1403, %v1387
      %1421 = vst.msk [vmem:[%s303 + $0x88] sm:$0xff] %vm1403, %v1388
      %1422 = vst.msk [vmem:[%s303 + $0x90] sm:$0xff] %vm1403, %v1389
      %1423 = vst.msk [vmem:[%s303 + $0x98] sm:$0xff] %vm1403, %v1390
      %1424 = vst.msk [vmem:[%s303 + $0xa0] sm:$0xff] %vm1403, %v1391
      %1425 = vst.msk [vmem:[%s303 + $0xa8] sm:$0xff] %vm1403, %v1392
      %1426 = vst.msk [vmem:[%s303 + $0xb0] sm:$0xff] %vm1403, %v1393
      %1427 = vst.msk [vmem:[%s303 + $0xb8] sm:$0xff] %vm1403, %v1394
      %1428 = vst.msk [vmem:[%s303 + $0xc0] sm:$0xff] %vm1403, %v1395
      %1429 = vst.msk [vmem:[%s303 + $0xc8] sm:$0xff] %vm1403, %v1396
      %1430 = vst.msk [vmem:[%s303 + $0xd0] sm:$0xff] %vm1403, %v1397
      %1431 = vst.msk [vmem:[%s303 + $0xd8] sm:$0xff] %vm1403, %v1398
      %1432 = vst.msk [vmem:[%s303 + $0xe0] sm:$0xff] %vm1403, %v1399
      %1433 = vst.msk [vmem:[%s303 + $0xe8] sm:$0xff] %vm1403, %v1400
      %1434 = vst.msk [vmem:[%s303 + $0xf0] sm:$0xff] %vm1403, %v1401
      %1435 = vst.msk [vmem:[%s303 + $0xf8] sm:$0xff] %vm1403, %v1402
      %s1436 = smul.u32 32, %s19
      %p1437 = scmp.lt.s32.totalorder %s1436, 255
      %s1438 = scalar_select %p1437, %s1436, 255
      %s1439 = smul.addr %s1438, 8
      %s1440 = scalar_lea.vmem %s7, %s1439
      // Predicated region
      $region49: #{alphanet_forward.1} parent=47 // pred_check
        %p1441 = pneg %p194
      $region50: #{alphanet_forward.1} parent=47 // pred_check_branch
        %1443 = sbr.rel (%p1441) target = $region52
      $region51: #{alphanet_forward.1} parent=47 // pred_region
        %s1444 = smul.u32 32, %s19
      $region52: #{alphanet_forward.1} parent=47 // pred_fallthru
        _
    $region48: #{alphanet_forward.1} parent=5 // pred_fallthru
      _
    %p1445 = scmp.le.s32.totalorder 2, %s14
    // Predicated region
    $region53: #{alphanet_forward.1} parent=5 // pred_check
      %p1446 = pneg %p1445
    $region54: #{alphanet_forward.1} parent=5 // pred_check_branch
      %1448 = sbr.rel (%p1446) target = $region56
    $region55: #{alphanet_forward.1} parent=5 // pred_region
      %s1449 = ssub.s32 %s14, 2
      // Predicated region
      $region57: #{alphanet_forward.1} parent=55 // pred_check
        %p1450 = pneg %p200
      $region58: #{alphanet_forward.1} parent=55 // pred_check_branch
        %1452 = sbr.rel (%p1450) target = $region60
      $region59: #{alphanet_forward.1} parent=55 // pred_region
        %s1453 = smul.u32 32, %s20
        %p1454 = scmp.lt.s32.totalorder %s1453, 255
        %s1455 = scalar_select %p1454, %s1453, 255
        %s1456 = smul.addr %s1455, 8
        %s1457 = scalar_lea.vmem %s7, %s1456
      $region60: #{alphanet_forward.1} parent=55 // pred_fallthru
        _
    $region56: #{alphanet_forward.1} parent=5 // pred_fallthru
      _
  $region6: #{alphanet_forward.1} parent=0 // loop_footer
    %s18 = sadd.s32 1, %s14
  $region7: #{alphanet_forward.1} parent=0 // loop_footer_branch
    %13 = sbr.rel target = $region3
  $region8: #{alphanet_forward.1} parent=0 // loop_exit
    _

</llo_original>
